<compile_context>
chip_gen: v7x
topology: tpu7x:2x2x1
jax: 0.10.0
libtpu: 0.0.40
codegen_flags: <defaults>
</compile_context>

<pallas_src>
import math

import jax
import jax.numpy as jnp
from jax.experimental import pallas as pl
from jax.experimental.pallas import tpu as pltpu

# small config consistent with the module (d_model divisible by n_heads)
D_MODEL = 32
N_HEADS = 4
D_K = D_MODEL // N_HEADS
HIDDEN = 4 * D_MODEL
EPS = 1e-6                       # config default eps=1e-06
INV_SCALE = 1.0 / math.sqrt(D_K)

# Set to jnp.bfloat16 on v6e/v7x for MXU-native matmuls (f32 accumulate kept);
# left at f32 here for tight parity with the f32 reference.
MATMUL_DTYPE = jnp.float32


def _layernorm(v, g, b):
    mu = jnp.mean(v, axis=-1, keepdims=True)
    var = jnp.mean((v - mu) ** 2, axis=-1, keepdims=True)
    return (v - mu) * jax.lax.rsqrt(var + EPS) * g + b


def _mm(a, b):
    return jnp.dot(a.astype(MATMUL_DTYPE), b.astype(MATMUL_DTYPE),
                   preferred_element_type=jnp.float32)


def vit_encoder_kernel(x_ref, vecs_ref, wqkv_ref, bqkv_ref, wo_ref,
                       w1_ref, b1_ref, w2_ref, o_ref):
    # One batch element (S, D) per grid step; the batch grid axis is "parallel".
    x = x_ref[...].astype(jnp.float32)                        # (S, D)
    vecs = vecs_ref[...]                                       # (6, D)
    ln1_g, ln1_b = vecs[0:1], vecs[1:2]
    ln2_g, ln2_b = vecs[2:3], vecs[3:4]
    b_o, b_2 = vecs[4:5], vecs[5:6]

    # ---- sub-block 1: LN -> MHA -> residual ----
    xn = _layernorm(x, ln1_g, ln1_b)                           # (S, D)

    # Fused Q/K/V projection: one MXU op (scale folded into W_q/b_q in wrapper).
    qkv = _mm(xn, wqkv_ref[...]) + bqkv_ref[...]               # (S, 3D)

    def split_heads(block):                                    # (S, D) -> (H, S, D_K)
        return jnp.stack(
            [block[:, h * D_K:(h + 1) * D_K] for h in range(N_HEADS)], axis=0)

    q = split_heads(qkv[:, 0 * D_MODEL:1 * D_MODEL])
    k = split_heads(qkv[:, 1 * D_MODEL:2 * D_MODEL])
    v = split_heads(qkv[:, 2 * D_MODEL:3 * D_MODEL])

    # Head-batched attention with a single shared, numerically stable softmax.
    s = jnp.einsum('hqd,hkd->hqk', q, k,
                   preferred_element_type=jnp.float32)         # (H, S, S)
    s = s - jnp.max(s, axis=-1, keepdims=True)
    p = jnp.exp(s)
    p = p * pl.reciprocal(jnp.sum(p, axis=-1, keepdims=True), approx=True)

    ctx = jnp.einsum('hqk,hkd->hqd', p, v,
                     preferred_element_type=jnp.float32)       # (H, S, D_K)

    # Output projection: head-batched matmul against per-head W_o row-blocks,
    # summed over heads (== concat_heads(ctx) @ W_o), then + b_o.
    attn = jnp.einsum('hsk,hkd->hsd',
                      ctx.astype(MATMUL_DTYPE),
                      wo_ref[...].astype(MATMUL_DTYPE),
                      preferred_element_type=jnp.float32).sum(axis=0) + b_o
    x = x + attn                                               # residual

    # ---- sub-block 2: LN -> MLP (exact-erf GELU) -> residual ----
    xn = _layernorm(x, ln2_g, ln2_b)
    h1 = _mm(xn, w1_ref[...]) + b1_ref[...]                    # (S, HIDDEN)
    h1 = 0.5 * h1 * (1.0 + jax.lax.erf(h1 * (1.0 / math.sqrt(2.0))))
    # TODO(synk): nn.Dropout treated as identity (inference/eval semantics).
    h2 = _mm(h1, w2_ref[...]) + b_2                            # (S, D)
    o_ref[...] = (h2 + x).astype(o_ref.dtype)


def _pack_params(params):
    """Wrapper-side (XLA, free) repacking: fused QKV weight/bias with the
    1/sqrt(d_k) scale folded into the Q columns, per-head W_o row-blocks, and
    all (1, D) vectors stacked into one (6, D) array."""
    wqkv = jnp.concatenate(
        [params["wq"] * INV_SCALE, params["wk"], params["wv"]], axis=1)   # (D, 3D)
    bqkv = jnp.concatenate(
        [params["bq"] * INV_SCALE, params["bk"], params["bv"]], axis=1)   # (1, 3D)
    wo_h = params["wo"].reshape(N_HEADS, D_K, D_MODEL)                    # (H, D_K, D)
    vecs = jnp.concatenate(
        [params["ln1_g"], params["ln1_b"], params["ln2_g"], params["ln2_b"],
         params["bo"], params["b2"]], axis=0)                             # (6, D)
    return vecs, wqkv, bqkv, wo_h, params["w1"], params["b1"], params["w2"]


@jax.jit
def vit_encoder(x, params):
    B, S, D = x.shape
    assert D == D_MODEL
    inputs = (x,) + _pack_params(params)

    in_specs = [
        pl.BlockSpec((None, S, D), lambda b: (b, 0, 0)),         # x: one batch/step
        pl.BlockSpec((6, D), lambda b: (0, 0)),                  # packed LN/bias vecs
        pl.BlockSpec((D, 3 * D), lambda b: (0, 0)),              # fused W_qkv
        pl.BlockSpec((1, 3 * D), lambda b: (0, 0)),              # fused b_qkv
        pl.BlockSpec((N_HEADS, D_K, D), lambda b: (0, 0, 0)),    # W_o per head
        pl.BlockSpec((D, HIDDEN), lambda b: (0, 0)),             # W1
        pl.BlockSpec((1, HIDDEN), lambda b: (0, 0)),             # b1
        pl.BlockSpec((HIDDEN, D), lambda b: (0, 0)),             # W2
    ]

    return pl.pallas_call(
        vit_encoder_kernel,
        out_shape=jax.ShapeDtypeStruct((B, S, D), x.dtype),
        grid_spec=pltpu.PrefetchScalarGridSpec(
            num_scalar_prefetch=0,
            grid=(B,),
            in_specs=in_specs,
            out_specs=pl.BlockSpec((None, S, D), lambda b: (b, 0, 0)),
        ),
        compiler_params=pltpu.CompilerParams(
            dimension_semantics=("parallel",)),
    )(*inputs)


def init_params(key):
    """Deterministic init mirroring nn.Linear / nn.LayerNorm shapes.
    Linear weights stored transposed as (in_features, out_features)."""
    ks = iter(jax.random.split(key, 16))

    def linear(din, dout):
        bound = 1.0 / math.sqrt(din)
        w = jax.random.uniform(next(ks), (din, dout), jnp.float32, -bound, bound)
        b = jax.random.uniform(next(ks), (1, dout), jnp.float32, -bound, bound)
        return w, b

    params = {}
    params["ln1_g"] = jnp.ones((1, D_MODEL), jnp.float32)
    params["ln1_b"] = jnp.zeros((1, D_MODEL), jnp.float32)
    params["wq"], params["bq"] = linear(D_MODEL, D_MODEL)
    params["wk"], params["bk"] = linear(D_MODEL, D_MODEL)
    params["wv"], params["bv"] = linear(D_MODEL, D_MODEL)
    params["wo"], params["bo"] = linear(D_MODEL, D_MODEL)
    params["ln2_g"] = jnp.ones((1, D_MODEL), jnp.float32)
    params["ln2_b"] = jnp.zeros((1, D_MODEL), jnp.float32)
    params["w1"], params["b1"] = linear(D_MODEL, HIDDEN)
    params["w2"], params["b2"] = linear(HIDDEN, D_MODEL)
    return params


def vit_encoder_ref(x, params):
    """Pure-JAX reference mirroring the PyTorch forward (dropout = identity)."""
    def ln(v, g, b):
        mu = v.mean(-1, keepdims=True)
        var = ((v - mu) ** 2).mean(-1, keepdims=True)
        return (v - mu) * jax.lax.rsqrt(var + EPS) * g + b

    B, S, D = x.shape
    res = x
    xn = ln(x, params["ln1_g"], params["ln1_b"])
    q = xn @ params["wq"] + params["bq"]
    k = xn @ params["wk"] + params["bk"]
    v = xn @ params["wv"] + params["bv"]
    q = q.reshape(B, S, N_HEADS, D_K).transpose(0, 2, 1, 3)
    k = k.reshape(B, S, N_HEADS, D_K).transpose(0, 2, 1, 3)
    v = v.reshape(B, S, N_HEADS, D_K).transpose(0, 2, 1, 3)
    s = jnp.einsum('bhqd,bhkd->bhqk', q, k) / math.sqrt(D_K)
    p = jax.nn.softmax(s, axis=-1)
    o = jnp.einsum('bhqk,bhkd->bhqd', p, v)
    o = o.transpose(0, 2, 1, 3).reshape(B, S, D)
    x = res + (o @ params["wo"] + params["bo"])
    res = x
    xn = ln(x, params["ln2_g"], params["ln2_b"])
    h1 = xn @ params["w1"] + params["b1"]
    h1 = 0.5 * h1 * (1.0 + jax.lax.erf(h1 / math.sqrt(2.0)))
    h2 = h1 @ params["w2"] + params["b2"]
    return h2 + res


if __name__ == "__main__":
    key = jax.random.PRNGKey(0)
    k_x, k_p = jax.random.split(key)

    B, S = 2, 8
    x = jax.random.normal(k_x, (B, S, D_MODEL), jnp.float32)
    params = init_params(k_p)

    out = vit_encoder(x, params)
    jax.block_until_ready(out)
    assert out.shape == (B, S, D_MODEL)

    ref = vit_encoder_ref(x, params)
    err = float(jnp.max(jnp.abs(out - ref)))
    assert jnp.allclose(out, ref, atol=1e-2, rtol=1e-2), err
    print("KERNEL_OK")
</pallas_src>

<mosaic_0001>
module attributes {stable_mosaic.version = 11 : i64} {
  func.func @vit_encoder_kernel(%arg0: i32, %arg1: memref<1x8x32xf32, #tpu.memory_space<vmem>>, %arg2: memref<6x32xf32, #tpu.memory_space<vmem>>, %arg3: memref<32x96xf32, #tpu.memory_space<vmem>>, %arg4: memref<1x96xf32, #tpu.memory_space<vmem>>, %arg5: memref<4x8x32xf32, #tpu.memory_space<vmem>>, %arg6: memref<32x128xf32, #tpu.memory_space<vmem>>, %arg7: memref<1x128xf32, #tpu.memory_space<vmem>>, %arg8: memref<128x32xf32, #tpu.memory_space<vmem>>, %arg9: memref<1x8x32xf32, #tpu.memory_space<vmem>>) attributes {dimension_semantics = [#tpu.dimension_semantics<parallel>], iteration_bounds = array<i64: 2>, scalar_prefetch = 0 : i64, scratch_operands = 0 : i64, tpu.core_type = #tpu.core_type<tc>, window_params = [{transform_indices = @transform_0, window_bounds = array<i64: 1, 8, 32>}, {pipeline_mode = #tpu.pipeline_mode<synchronous>, transform_indices = @transform_1, window_bounds = array<i64: 6, 32>}, {pipeline_mode = #tpu.pipeline_mode<synchronous>, transform_indices = @transform_2, window_bounds = array<i64: 32, 96>}, {pipeline_mode = #tpu.pipeline_mode<synchronous>, transform_indices = @transform_3, window_bounds = array<i64: 1, 96>}, {pipeline_mode = #tpu.pipeline_mode<synchronous>, transform_indices = @transform_4, window_bounds = array<i64: 4, 8, 32>}, {pipeline_mode = #tpu.pipeline_mode<synchronous>, transform_indices = @transform_5, window_bounds = array<i64: 32, 128>}, {pipeline_mode = #tpu.pipeline_mode<synchronous>, transform_indices = @transform_6, window_bounds = array<i64: 1, 128>}, {pipeline_mode = #tpu.pipeline_mode<synchronous>, transform_indices = @transform_7, window_bounds = array<i64: 128, 32>}, {transform_indices = @transform_8, window_bounds = array<i64: 1, 8, 32>}]} {
    %c0 = arith.constant 0 : index
    %c0_0 = arith.constant 0 : index
    %c0_1 = arith.constant 0 : index
    %0 = vector.load %arg1[%c0, %c0_0, %c0_1] : memref<1x8x32xf32, #tpu.memory_space<vmem>>, vector<1x8x32xf32>
    %1 = vector.shape_cast %0 : vector<1x8x32xf32> to vector<8x32xf32>
    %c0_2 = arith.constant 0 : index
    %c0_3 = arith.constant 0 : index
    %2 = vector.load %arg2[%c0_2, %c0_3] : memref<6x32xf32, #tpu.memory_space<vmem>>, vector<6x32xf32>
    %3 = vector.extract_strided_slice %2 {offsets = [0, 0], sizes = [1, 32], strides = [1, 1]} : vector<6x32xf32> to vector<1x32xf32>
    %4 = vector.extract_strided_slice %2 {offsets = [1, 0], sizes = [1, 32], strides = [1, 1]} : vector<6x32xf32> to vector<1x32xf32>
    %5 = vector.extract_strided_slice %2 {offsets = [2, 0], sizes = [1, 32], strides = [1, 1]} : vector<6x32xf32> to vector<1x32xf32>
    %6 = vector.extract_strided_slice %2 {offsets = [3, 0], sizes = [1, 32], strides = [1, 1]} : vector<6x32xf32> to vector<1x32xf32>
    %7 = vector.extract_strided_slice %2 {offsets = [4, 0], sizes = [1, 32], strides = [1, 1]} : vector<6x32xf32> to vector<1x32xf32>
    %8 = vector.extract_strided_slice %2 {offsets = [5, 0], sizes = [1, 32], strides = [1, 1]} : vector<6x32xf32> to vector<1x32xf32>
    %cst = arith.constant dense<0.000000e+00> : vector<8xf32>
    %9 = vector.multi_reduction <add>, %1, %cst [1] : vector<8x32xf32> to vector<8xf32>
    %10 = vector.shape_cast %9 : vector<8xf32> to vector<8x1xf32>
    %cst_4 = arith.constant 3.200000e+01 : f32
    %11 = vector.broadcast %cst_4 : f32 to vector<8x1xf32>
    %12 = arith.divf %10, %11 : vector<8x1xf32>
    %13 = vector.broadcast %12 : vector<8x1xf32> to vector<8x32xf32>
    %14 = arith.subf %1, %13 : vector<8x32xf32>
    %15 = arith.mulf %14, %14 : vector<8x32xf32>
    %cst_5 = arith.constant dense<0.000000e+00> : vector<8xf32>
    %16 = vector.multi_reduction <add>, %15, %cst_5 [1] : vector<8x32xf32> to vector<8xf32>
    %17 = vector.shape_cast %16 : vector<8xf32> to vector<8x1xf32>
    %cst_6 = arith.constant 3.200000e+01 : f32
    %18 = vector.broadcast %cst_6 : f32 to vector<8x1xf32>
    %19 = arith.divf %17, %18 : vector<8x1xf32>
    %20 = vector.broadcast %12 : vector<8x1xf32> to vector<8x32xf32>
    %21 = arith.subf %1, %20 : vector<8x32xf32>
    %cst_7 = arith.constant 9.99999997E-7 : f32
    %22 = vector.broadcast %cst_7 : f32 to vector<8x1xf32>
    %23 = arith.addf %19, %22 : vector<8x1xf32>
    %24 = math.rsqrt %23 : vector<8x1xf32>
    %25 = vector.broadcast %24 : vector<8x1xf32> to vector<8x32xf32>
    %26 = arith.mulf %21, %25 : vector<8x32xf32>
    %27 = vector.broadcast %3 : vector<1x32xf32> to vector<8x32xf32>
    %28 = arith.mulf %26, %27 : vector<8x32xf32>
    %29 = vector.broadcast %4 : vector<1x32xf32> to vector<8x32xf32>
    %30 = arith.addf %28, %29 : vector<8x32xf32>
    %c0_8 = arith.constant 0 : index
    %c0_9 = arith.constant 0 : index
    %31 = vector.load %arg3[%c0_8, %c0_9] : memref<32x96xf32, #tpu.memory_space<vmem>>, vector<32x96xf32>
    %cst_10 = arith.constant dense<0.000000e+00> : vector<8x96xf32>
    %32 = tpu.matmul %30, %31, %cst_10 {dimension_numbers = #tpu.dot_dimension_numbers<[1], [0], [0], [1], [0, 0, 1, 1], [], []>} : vector<8x32xf32>, vector<32x96xf32>, vector<8x96xf32> -> vector<8x96xf32>
    %c0_11 = arith.constant 0 : index
    %c0_12 = arith.constant 0 : index
    %33 = vector.load %arg4[%c0_11, %c0_12] : memref<1x96xf32, #tpu.memory_space<vmem>>, vector<1x96xf32>
    %34 = vector.broadcast %33 : vector<1x96xf32> to vector<8x96xf32>
    %35 = arith.addf %32, %34 : vector<8x96xf32>
    %36 = vector.extract_strided_slice %35 {offsets = [0, 0], sizes = [8, 32], strides = [1, 1]} : vector<8x96xf32> to vector<8x32xf32>
    %37 = vector.extract_strided_slice %36 {offsets = [0, 0], sizes = [8, 8], strides = [1, 1]} : vector<8x32xf32> to vector<8x8xf32>
    %38 = vector.extract_strided_slice %36 {offsets = [0, 8], sizes = [8, 8], strides = [1, 1]} : vector<8x32xf32> to vector<8x8xf32>
    %39 = vector.extract_strided_slice %36 {offsets = [0, 16], sizes = [8, 8], strides = [1, 1]} : vector<8x32xf32> to vector<8x8xf32>
    %40 = vector.extract_strided_slice %36 {offsets = [0, 24], sizes = [8, 8], strides = [1, 1]} : vector<8x32xf32> to vector<8x8xf32>
    %41 = vector.shape_cast %37 : vector<8x8xf32> to vector<1x8x8xf32>
    %42 = vector.shape_cast %38 : vector<8x8xf32> to vector<1x8x8xf32>
    %43 = vector.shape_cast %39 : vector<8x8xf32> to vector<1x8x8xf32>
    %44 = vector.shape_cast %40 : vector<8x8xf32> to vector<1x8x8xf32>
    %45 = tpu.concatenate %41, %42, %43, %44 in 0 : vector<1x8x8xf32>, vector<1x8x8xf32>, vector<1x8x8xf32>, vector<1x8x8xf32> -> vector<4x8x8xf32>
    %46 = vector.extract_strided_slice %35 {offsets = [0, 32], sizes = [8, 32], strides = [1, 1]} : vector<8x96xf32> to vector<8x32xf32>
    %47 = vector.extract_strided_slice %46 {offsets = [0, 0], sizes = [8, 8], strides = [1, 1]} : vector<8x32xf32> to vector<8x8xf32>
    %48 = vector.extract_strided_slice %46 {offsets = [0, 8], sizes = [8, 8], strides = [1, 1]} : vector<8x32xf32> to vector<8x8xf32>
    %49 = vector.extract_strided_slice %46 {offsets = [0, 16], sizes = [8, 8], strides = [1, 1]} : vector<8x32xf32> to vector<8x8xf32>
    %50 = vector.extract_strided_slice %46 {offsets = [0, 24], sizes = [8, 8], strides = [1, 1]} : vector<8x32xf32> to vector<8x8xf32>
    %51 = vector.shape_cast %47 : vector<8x8xf32> to vector<1x8x8xf32>
    %52 = vector.shape_cast %48 : vector<8x8xf32> to vector<1x8x8xf32>
    %53 = vector.shape_cast %49 : vector<8x8xf32> to vector<1x8x8xf32>
    %54 = vector.shape_cast %50 : vector<8x8xf32> to vector<1x8x8xf32>
    %55 = tpu.concatenate %51, %52, %53, %54 in 0 : vector<1x8x8xf32>, vector<1x8x8xf32>, vector<1x8x8xf32>, vector<1x8x8xf32> -> vector<4x8x8xf32>
    %56 = vector.extract_strided_slice %35 {offsets = [0, 64], sizes = [8, 32], strides = [1, 1]} : vector<8x96xf32> to vector<8x32xf32>
    %57 = vector.extract_strided_slice %56 {offsets = [0, 0], sizes = [8, 8], strides = [1, 1]} : vector<8x32xf32> to vector<8x8xf32>
    %58 = vector.extract_strided_slice %56 {offsets = [0, 8], sizes = [8, 8], strides = [1, 1]} : vector<8x32xf32> to vector<8x8xf32>
    %59 = vector.extract_strided_slice %56 {offsets = [0, 16], sizes = [8, 8], strides = [1, 1]} : vector<8x32xf32> to vector<8x8xf32>
    %60 = vector.extract_strided_slice %56 {offsets = [0, 24], sizes = [8, 8], strides = [1, 1]} : vector<8x32xf32> to vector<8x8xf32>
    %61 = vector.shape_cast %57 : vector<8x8xf32> to vector<1x8x8xf32>
    %62 = vector.shape_cast %58 : vector<8x8xf32> to vector<1x8x8xf32>
    %63 = vector.shape_cast %59 : vector<8x8xf32> to vector<1x8x8xf32>
    %64 = vector.shape_cast %60 : vector<8x8xf32> to vector<1x8x8xf32>
    %65 = tpu.concatenate %61, %62, %63, %64 in 0 : vector<1x8x8xf32>, vector<1x8x8xf32>, vector<1x8x8xf32>, vector<1x8x8xf32> -> vector<4x8x8xf32>
    "tpu.trace_start"() <{level = 10 : i32, message = "hqd,hkd->hqk"}> : () -> ()
    %cst_13 = arith.constant dense<0.000000e+00> : vector<4x8x8xf32>
    %66 = tpu.matmul %45, %55, %cst_13 {dimension_numbers = #tpu.dot_dimension_numbers<[2], [2], [1], [1], [0, 0, 0, 1, 1, 1], [0], [0]>} : vector<4x8x8xf32>, vector<4x8x8xf32>, vector<4x8x8xf32> -> vector<4x8x8xf32>
    "tpu.trace_stop"() : () -> ()
    %cst_14 = arith.constant dense<0xFF800000> : vector<4x8xf32>
    %67 = vector.multi_reduction <maximumf>, %66, %cst_14 [2] : vector<4x8x8xf32> to vector<4x8xf32>
    %68 = vector.shape_cast %67 : vector<4x8xf32> to vector<4x8x1xf32>
    %69 = vector.broadcast %68 : vector<4x8x1xf32> to vector<4x8x8xf32>
    %70 = arith.subf %66, %69 : vector<4x8x8xf32>
    %71 = math.exp %70 : vector<4x8x8xf32>
    %cst_15 = arith.constant dense<0.000000e+00> : vector<4x8xf32>
    %72 = vector.multi_reduction <add>, %71, %cst_15 [2] : vector<4x8x8xf32> to vector<4x8xf32>
    %73 = vector.shape_cast %72 : vector<4x8xf32> to vector<4x8x1xf32>
    %74 = tpu.reciprocal %73 {approx = true} : vector<4x8x1xf32> -> vector<4x8x1xf32>
    %75 = vector.broadcast %74 : vector<4x8x1xf32> to vector<4x8x8xf32>
    %76 = arith.mulf %71, %75 : vector<4x8x8xf32>
    "tpu.trace_start"() <{level = 10 : i32, message = "hqk,hkd->hqd"}> : () -> ()
    %cst_16 = arith.constant dense<0.000000e+00> : vector<4x8x8xf32>
    %77 = tpu.matmul %76, %65, %cst_16 {dimension_numbers = #tpu.dot_dimension_numbers<[2], [1], [1], [2], [0, 0, 0, 1, 1, 2], [0], [0]>} : vector<4x8x8xf32>, vector<4x8x8xf32>, vector<4x8x8xf32> -> vector<4x8x8xf32>
    "tpu.trace_stop"() : () -> ()
    %c0_17 = arith.constant 0 : index
    %c0_18 = arith.constant 0 : index
    %c0_19 = arith.constant 0 : index
    %78 = vector.load %arg5[%c0_17, %c0_18, %c0_19] : memref<4x8x32xf32, #tpu.memory_space<vmem>>, vector<4x8x32xf32>
    "tpu.trace_start"() <{level = 10 : i32, message = "hsk,hkd->hsd"}> : () -> ()
    %cst_20 = arith.constant dense<0.000000e+00> : vector<4x8x32xf32>
    %79 = tpu.matmul %77, %78, %cst_20 {dimension_numbers = #tpu.dot_dimension_numbers<[2], [1], [1], [2], [0, 0, 0, 1, 1, 2], [0], [0]>} : vector<4x8x8xf32>, vector<4x8x32xf32>, vector<4x8x32xf32> -> vector<4x8x32xf32>
    "tpu.trace_stop"() : () -> ()
    %cst_21 = arith.constant dense<0.000000e+00> : vector<8x32xf32>
    %80 = vector.multi_reduction <add>, %79, %cst_21 [0] : vector<4x8x32xf32> to vector<8x32xf32>
    %81 = vector.broadcast %7 : vector<1x32xf32> to vector<8x32xf32>
    %82 = arith.addf %80, %81 : vector<8x32xf32>
    %83 = arith.addf %1, %82 : vector<8x32xf32>
    %cst_22 = arith.constant dense<0.000000e+00> : vector<8xf32>
    %84 = vector.multi_reduction <add>, %83, %cst_22 [1] : vector<8x32xf32> to vector<8xf32>
    %85 = vector.shape_cast %84 : vector<8xf32> to vector<8x1xf32>
    %cst_23 = arith.constant 3.200000e+01 : f32
    %86 = vector.broadcast %cst_23 : f32 to vector<8x1xf32>
    %87 = arith.divf %85, %86 : vector<8x1xf32>
    %88 = vector.broadcast %87 : vector<8x1xf32> to vector<8x32xf32>
    %89 = arith.subf %83, %88 : vector<8x32xf32>
    %90 = arith.mulf %89, %89 : vector<8x32xf32>
    %cst_24 = arith.constant dense<0.000000e+00> : vector<8xf32>
    %91 = vector.multi_reduction <add>, %90, %cst_24 [1] : vector<8x32xf32> to vector<8xf32>
    %92 = vector.shape_cast %91 : vector<8xf32> to vector<8x1xf32>
    %cst_25 = arith.constant 3.200000e+01 : f32
    %93 = vector.broadcast %cst_25 : f32 to vector<8x1xf32>
    %94 = arith.divf %92, %93 : vector<8x1xf32>
    %95 = vector.broadcast %87 : vector<8x1xf32> to vector<8x32xf32>
    %96 = arith.subf %83, %95 : vector<8x32xf32>
    %cst_26 = arith.constant 9.99999997E-7 : f32
    %97 = vector.broadcast %cst_26 : f32 to vector<8x1xf32>
    %98 = arith.addf %94, %97 : vector<8x1xf32>
    %99 = math.rsqrt %98 : vector<8x1xf32>
    %100 = vector.broadcast %99 : vector<8x1xf32> to vector<8x32xf32>
    %101 = arith.mulf %96, %100 : vector<8x32xf32>
    %102 = vector.broadcast %5 : vector<1x32xf32> to vector<8x32xf32>
    %103 = arith.mulf %101, %102 : vector<8x32xf32>
    %104 = vector.broadcast %6 : vector<1x32xf32> to vector<8x32xf32>
    %105 = arith.addf %103, %104 : vector<8x32xf32>
    %c0_27 = arith.constant 0 : index
    %c0_28 = arith.constant 0 : index
    %106 = vector.load %arg6[%c0_27, %c0_28] : memref<32x128xf32, #tpu.memory_space<vmem>>, vector<32x128xf32>
    %cst_29 = arith.constant dense<0.000000e+00> : vector<8x128xf32>
    %107 = tpu.matmul %105, %106, %cst_29 {dimension_numbers = #tpu.dot_dimension_numbers<[1], [0], [0], [1], [0, 0, 1, 1], [], []>} : vector<8x32xf32>, vector<32x128xf32>, vector<8x128xf32> -> vector<8x128xf32>
    %c0_30 = arith.constant 0 : index
    %c0_31 = arith.constant 0 : index
    %108 = vector.load %arg7[%c0_30, %c0_31] : memref<1x128xf32, #tpu.memory_space<vmem>>, vector<1x128xf32>
    %109 = vector.broadcast %108 : vector<1x128xf32> to vector<8x128xf32>
    %110 = arith.addf %107, %109 : vector<8x128xf32>
    %cst_32 = arith.constant 5.000000e-01 : f32
    %111 = vector.broadcast %cst_32 : f32 to vector<8x128xf32>
    %112 = arith.mulf %111, %110 : vector<8x128xf32>
    %cst_33 = arith.constant 0.707106769 : f32
    %113 = vector.broadcast %cst_33 : f32 to vector<8x128xf32>
    %114 = arith.mulf %110, %113 : vector<8x128xf32>
    %115 = math.erf %114 : vector<8x128xf32>
    %cst_34 = arith.constant 1.000000e+00 : f32
    %116 = vector.broadcast %cst_34 : f32 to vector<8x128xf32>
    %117 = arith.addf %116, %115 : vector<8x128xf32>
    %118 = arith.mulf %112, %117 : vector<8x128xf32>
    %c0_35 = arith.constant 0 : index
    %c0_36 = arith.constant 0 : index
    %119 = vector.load %arg8[%c0_35, %c0_36] : memref<128x32xf32, #tpu.memory_space<vmem>>, vector<128x32xf32>
    %cst_37 = arith.constant dense<0.000000e+00> : vector<8x32xf32>
    %120 = tpu.matmul %118, %119, %cst_37 {dimension_numbers = #tpu.dot_dimension_numbers<[1], [0], [0], [1], [0, 0, 1, 1], [], []>} : vector<8x128xf32>, vector<128x32xf32>, vector<8x32xf32> -> vector<8x32xf32>
    %121 = vector.broadcast %8 : vector<1x32xf32> to vector<8x32xf32>
    %122 = arith.addf %120, %121 : vector<8x32xf32>
    %123 = arith.addf %122, %83 : vector<8x32xf32>
    %c0_38 = arith.constant 0 : index
    %c0_39 = arith.constant 0 : index
    %c0_40 = arith.constant 0 : index
    %124 = vector.load %arg9[%c0_38, %c0_39, %c0_40] : memref<1x8x32xf32, #tpu.memory_space<vmem>>, vector<1x8x32xf32>
    %125 = vector.shape_cast %124 : vector<1x8x32xf32> to vector<8x32xf32>
    %126 = vector.shape_cast %123 : vector<8x32xf32> to vector<1x8x32xf32>
    tpu.vector_store %arg9[%c0_38, %c0_39, %c0_40], %126 {strides = array<i32>} : memref<1x8x32xf32, #tpu.memory_space<vmem>>, vector<1x8x32xf32>,
    return
  }
  func.func @transform_0(%arg0: i32) -> (i32, i32, i32) {
    %c0_i32 = arith.constant 0 : i32
    %c0_i32_0 = arith.constant 0 : i32
    %c0_i32_1 = arith.constant 0 : i32
    return %arg0, %c0_i32, %c0_i32_0 : i32, i32, i32
  }
  func.func @transform_1(%arg0: i32) -> (i32, i32) {
    %c0_i32 = arith.constant 0 : i32
    %c0_i32_0 = arith.constant 0 : i32
    %c0_i32_1 = arith.constant 0 : i32
    return %c0_i32, %c0_i32_0 : i32, i32
  }
  func.func @transform_2(%arg0: i32) -> (i32, i32) {
    %c0_i32 = arith.constant 0 : i32
    %c0_i32_0 = arith.constant 0 : i32
    %c0_i32_1 = arith.constant 0 : i32
    return %c0_i32, %c0_i32_0 : i32, i32
  }
  func.func @transform_3(%arg0: i32) -> (i32, i32) {
    %c0_i32 = arith.constant 0 : i32
    %c0_i32_0 = arith.constant 0 : i32
    %c0_i32_1 = arith.constant 0 : i32
    return %c0_i32, %c0_i32_0 : i32, i32
  }
  func.func @transform_4(%arg0: i32) -> (i32, i32, i32) {
    %c0_i32 = arith.constant 0 : i32
    %c0_i32_0 = arith.constant 0 : i32
    %c0_i32_1 = arith.constant 0 : i32
    %c0_i32_2 = arith.constant 0 : i32
    return %c0_i32, %c0_i32_0, %c0_i32_1 : i32, i32, i32
  }
  func.func @transform_5(%arg0: i32) -> (i32, i32) {
    %c0_i32 = arith.constant 0 : i32
    %c0_i32_0 = arith.constant 0 : i32
    %c0_i32_1 = arith.constant 0 : i32
    return %c0_i32, %c0_i32_0 : i32, i32
  }
  func.func @transform_6(%arg0: i32) -> (i32, i32) {
    %c0_i32 = arith.constant 0 : i32
    %c0_i32_0 = arith.constant 0 : i32
    %c0_i32_1 = arith.constant 0 : i32
    return %c0_i32, %c0_i32_0 : i32, i32
  }
  func.func @transform_7(%arg0: i32) -> (i32, i32) {
    %c0_i32 = arith.constant 0 : i32
    %c0_i32_0 = arith.constant 0 : i32
    %c0_i32_1 = arith.constant 0 : i32
    return %c0_i32, %c0_i32_0 : i32, i32
  }
  func.func @transform_8(%arg0: i32) -> (i32, i32, i32) {
    %c0_i32 = arith.constant 0 : i32
    %c0_i32_0 = arith.constant 0 : i32
    %c0_i32_1 = arith.constant 0 : i32
    return %arg0, %c0_i32, %c0_i32_0 : i32, i32, i32
  }
}

</mosaic_0001>

<llo_original>
// kernel: vit_encoder.1
$region0: #{vit_encoder.1}
  #allocation0 [shape = 'u32[]', space=smem, size = 0x4, offset = 0x4, fixed_abs, tag = 'smem constant byte address 0x4 - core index']
  #allocation1 [shape = 'u32[144,128]{1,0:T(1,128)}', space=vmem, size = 0x12000, scoped, tag = 'internal scratch']
  %s0 = inlined_call_operand.vmem [shape: f32[2,8,32], index: 0, kind: input, shape index: {}]
  %s1 = inlined_call_operand.vmem [shape: f32[6,32], index: 1, kind: input, shape index: {}]
  %s2 = inlined_call_operand.vmem [shape: f32[32,96], index: 2, kind: input, shape index: {}]
  %s3 = inlined_call_operand.vmem [shape: f32[1,96], index: 3, kind: input, shape index: {}]
  %s4 = inlined_call_operand.vmem [shape: f32[4,8,32], index: 4, kind: input, shape index: {}]
  %s5 = inlined_call_operand.vmem [shape: f32[32,128], index: 5, kind: input, shape index: {}]
  %s6 = inlined_call_operand.vmem [shape: f32[1,128], index: 6, kind: input, shape index: {}]
  %s7 = inlined_call_operand.vmem [shape: f32[128,32], index: 7, kind: input, shape index: {}]
  %s8 = inlined_call_operand.hbm [shape: f32[2,8,32], index: 8, kind: output, shape index: {}]
  %s9 = sld [smem:[#allocation0]]
  $region65: #{vit_encoder.1} parent=0
    _
  %s11 = ssub.s32 1, %s9
  %s12 = scalar_select 0, %s11, %s9
  $region1: #{vit_encoder.1} parent=0
    #allocation2 [shape = 'u8[8192]{0}', space=vmem, size = 0x2000, scoped, tag = 'output window, operand 0']
    #allocation3 [shape = 's32[2]{0}', space=sflag, size = 0x8, scoped, tag = 'scoped memory for vit_encoder.1']
    %13 = vsyncpa [#allocation3], 0
    %s14 = scalar_lea.sflag [#allocation3], 1
    %15 = vsyncpa %s14, 0
    loop: start=0, step=1, limit=4
    $region2: #{vit_encoder.1} parent=1 // loop_pre_header
      _
    $region3: #{vit_encoder.1} parent=1 // loop_header
      %s17 = sphi 0, %s21
      %p18 = scmp.ge.s32.totalorder %s17, 4
      %s27 = sphi 0, %s29
      %s30 = sphi 0, %s27
      %s31 = sphi 0, %s30
      %s47 = sphi 0, %s31
      %s51 = sphi 0, %s51
      %s53 = sphi 0, %s51
      %s54 = sphi 0, %s53
      %s68 = sphi 0, %s54
      %s72 = sphi 0, %s72
      %s74 = sphi 0, %s72
      %s75 = sphi 0, %s74
      %s89 = sphi 0, %s75
      %s93 = sphi 0, %s93
      %s95 = sphi 0, %s93
      %s96 = sphi 0, %s95
      %s110 = sphi 0, %s96
      %s114 = sphi 0, %s114
      %s116 = sphi 0, %s114
      %s117 = sphi 0, %s116
      %s131 = sphi 0, %s117
      %s135 = sphi 0, %s135
      %s137 = sphi 0, %s135
      %s138 = sphi 0, %s137
      %s152 = sphi 0, %s138
      %s156 = sphi 0, %s156
      %s158 = sphi 0, %s156
      %s159 = sphi 0, %s158
      %s173 = sphi 0, %s159
      %s177 = sphi 0, %s177
      %s179 = sphi 0, %s177
      %s180 = sphi 0, %s179
      %s194 = sphi 0, %s180
      %s200 = sphi 0, %s202
      %s203 = sphi 0, %s200
      %s204 = sphi 0, %s203
      %s220 = sphi 0, %s204
    $region4: #{vit_encoder.1} parent=1 // loop_header_branch
      %20 = sbr.rel (%p18) target = $region8
    $region5: #{vit_encoder.1} parent=1 // loop_body
      %s22 = ssub.s32 %s17, 1
      %s23 = ssub.s32 %s17, 2
      %s24 = sadd.s32 %s17, 1
      %s25 = ssub.s32 %s17, %s24
      %p26 = scmp.eq.s32.totalorder %s25, 0
      %s28 = sadd.s32 %s27, 1
      %s29 = scalar_select %p26, %s27, %s28
      %p32 = pneg %p26
      %p33 = scmp.eq.s32.totalorder %s17, 1
      %p34 = por %p32, %p33
      %p35 = scmp.ne.s32.totalorder %s27, %s30
      %p36 = scmp.eq.s32.totalorder %s17, 0
      %p37 = por %p35, %p36
      %p38 = scmp.ne.s32.totalorder %s27, %s30
      %p39 = scmp.eq.s32.totalorder %s22, 1
      %p40 = por %p38, %p39
      %p41 = scmp.ne.s32.totalorder %s30, %s31
      %p42 = scmp.eq.s32.totalorder %s22, 0
      %p43 = por %p41, %p42
      %p44 = scmp.ne.s32.totalorder %s30, %s31
      %p45 = scmp.eq.s32.totalorder %s23, 1
      %p46 = por %p44, %p45
      %p48 = scmp.ne.s32.totalorder %s31, %s47
      %p49 = scmp.eq.s32.totalorder %s23, 0
      %p50 = por %p48, %p49
      %s52 = sadd.s32 %s51, 1
      %p55 = scmp.eq.s32.totalorder %s17, 1
      %p56 = scmp.ne.s32.totalorder %s51, %s53
      %p57 = scmp.eq.s32.totalorder %s17, 0
      %p58 = por %p56, %p57
      %p59 = scmp.ne.s32.totalorder %s51, %s53
      %p60 = scmp.eq.s32.totalorder %s22, 1
      %p61 = por %p59, %p60
      %p62 = scmp.ne.s32.totalorder %s53, %s54
      %p63 = scmp.eq.s32.totalorder %s22, 0
      %p64 = por %p62, %p63
      %p65 = scmp.ne.s32.totalorder %s53, %s54
      %p66 = scmp.eq.s32.totalorder %s23, 1
      %p67 = por %p65, %p66
      %p69 = scmp.ne.s32.totalorder %s54, %s68
      %p70 = scmp.eq.s32.totalorder %s23, 0
      %p71 = por %p69, %p70
      %s73 = sadd.s32 %s72, 1
      %p76 = scmp.eq.s32.totalorder %s17, 1
      %p77 = scmp.ne.s32.totalorder %s72, %s74
      %p78 = scmp.eq.s32.totalorder %s17, 0
      %p79 = por %p77, %p78
      %p80 = scmp.ne.s32.totalorder %s72, %s74
      %p81 = scmp.eq.s32.totalorder %s22, 1
      %p82 = por %p80, %p81
      %p83 = scmp.ne.s32.totalorder %s74, %s75
      %p84 = scmp.eq.s32.totalorder %s22, 0
      %p85 = por %p83, %p84
      %p86 = scmp.ne.s32.totalorder %s74, %s75
      %p87 = scmp.eq.s32.totalorder %s23, 1
      %p88 = por %p86, %p87
      %p90 = scmp.ne.s32.totalorder %s75, %s89
      %p91 = scmp.eq.s32.totalorder %s23, 0
      %p92 = por %p90, %p91
      %s94 = sadd.s32 %s93, 1
      %p97 = scmp.eq.s32.totalorder %s17, 1
      %p98 = scmp.ne.s32.totalorder %s93, %s95
      %p99 = scmp.eq.s32.totalorder %s17, 0
      %p100 = por %p98, %p99
      %p101 = scmp.ne.s32.totalorder %s93, %s95
      %p102 = scmp.eq.s32.totalorder %s22, 1
      %p103 = por %p101, %p102
      %p104 = scmp.ne.s32.totalorder %s95, %s96
      %p105 = scmp.eq.s32.totalorder %s22, 0
      %p106 = por %p104, %p105
      %p107 = scmp.ne.s32.totalorder %s95, %s96
      %p108 = scmp.eq.s32.totalorder %s23, 1
      %p109 = por %p107, %p108
      %p111 = scmp.ne.s32.totalorder %s96, %s110
      %p112 = scmp.eq.s32.totalorder %s23, 0
      %p113 = por %p111, %p112
      %s115 = sadd.s32 %s114, 1
      %p118 = scmp.eq.s32.totalorder %s17, 1
      %p119 = scmp.ne.s32.totalorder %s114, %s116
      %p120 = scmp.eq.s32.totalorder %s17, 0
      %p121 = por %p119, %p120
      %p122 = scmp.ne.s32.totalorder %s114, %s116
      %p123 = scmp.eq.s32.totalorder %s22, 1
      %p124 = por %p122, %p123
      %p125 = scmp.ne.s32.totalorder %s116, %s117
      %p126 = scmp.eq.s32.totalorder %s22, 0
      %p127 = por %p125, %p126
      %p128 = scmp.ne.s32.totalorder %s116, %s117
      %p129 = scmp.eq.s32.totalorder %s23, 1
      %p130 = por %p128, %p129
      %p132 = scmp.ne.s32.totalorder %s117, %s131
      %p133 = scmp.eq.s32.totalorder %s23, 0
      %p134 = por %p132, %p133
      %s136 = sadd.s32 %s135, 1
      %p139 = scmp.eq.s32.totalorder %s17, 1
      %p140 = scmp.ne.s32.totalorder %s135, %s137
      %p141 = scmp.eq.s32.totalorder %s17, 0
      %p142 = por %p140, %p141
      %p143 = scmp.ne.s32.totalorder %s135, %s137
      %p144 = scmp.eq.s32.totalorder %s22, 1
      %p145 = por %p143, %p144
      %p146 = scmp.ne.s32.totalorder %s137, %s138
      %p147 = scmp.eq.s32.totalorder %s22, 0
      %p148 = por %p146, %p147
      %p149 = scmp.ne.s32.totalorder %s137, %s138
      %p150 = scmp.eq.s32.totalorder %s23, 1
      %p151 = por %p149, %p150
      %p153 = scmp.ne.s32.totalorder %s138, %s152
      %p154 = scmp.eq.s32.totalorder %s23, 0
      %p155 = por %p153, %p154
      %s157 = sadd.s32 %s156, 1
      %p160 = scmp.eq.s32.totalorder %s17, 1
      %p161 = scmp.ne.s32.totalorder %s156, %s158
      %p162 = scmp.eq.s32.totalorder %s17, 0
      %p163 = por %p161, %p162
      %p164 = scmp.ne.s32.totalorder %s156, %s158
      %p165 = scmp.eq.s32.totalorder %s22, 1
      %p166 = por %p164, %p165
      %p167 = scmp.ne.s32.totalorder %s158, %s159
      %p168 = scmp.eq.s32.totalorder %s22, 0
      %p169 = por %p167, %p168
      %p170 = scmp.ne.s32.totalorder %s158, %s159
      %p171 = scmp.eq.s32.totalorder %s23, 1
      %p172 = por %p170, %p171
      %p174 = scmp.ne.s32.totalorder %s159, %s173
      %p175 = scmp.eq.s32.totalorder %s23, 0
      %p176 = por %p174, %p175
      %s178 = sadd.s32 %s177, 1
      %p181 = scmp.eq.s32.totalorder %s17, 1
      %p182 = scmp.ne.s32.totalorder %s177, %s179
      %p183 = scmp.eq.s32.totalorder %s17, 0
      %p184 = por %p182, %p183
      %p185 = scmp.ne.s32.totalorder %s177, %s179
      %p186 = scmp.eq.s32.totalorder %s22, 1
      %p187 = por %p185, %p186
      %p188 = scmp.ne.s32.totalorder %s179, %s180
      %p189 = scmp.eq.s32.totalorder %s22, 0
      %p190 = por %p188, %p189
      %p191 = scmp.ne.s32.totalorder %s179, %s180
      %p192 = scmp.eq.s32.totalorder %s23, 1
      %p193 = por %p191, %p192
      %p195 = scmp.ne.s32.totalorder %s180, %s194
      %p196 = scmp.eq.s32.totalorder %s23, 0
      %p197 = por %p195, %p196
      %s198 = ssub.s32 %s17, %s24
      %p199 = scmp.eq.s32.totalorder %s198, 0
      %s201 = sadd.s32 %s200, 1
      %s202 = scalar_select %p199, %s200, %s201
      %p205 = pneg %p199
      %p206 = scmp.eq.s32.totalorder %s17, 1
      %p207 = por %p205, %p206
      %p208 = scmp.ne.s32.totalorder %s200, %s203
      %p209 = scmp.eq.s32.totalorder %s17, 0
      %p210 = por %p208, %p209
      %p211 = scmp.ne.s32.totalorder %s200, %s203
      %p212 = scmp.eq.s32.totalorder %s22, 1
      %p213 = por %p211, %p212
      %p214 = scmp.ne.s32.totalorder %s203, %s204
      %p215 = scmp.eq.s32.totalorder %s22, 0
      %p216 = por %p214, %p215
      %p217 = scmp.ne.s32.totalorder %s203, %s204
      %p218 = scmp.eq.s32.totalorder %s23, 1
      %p219 = por %p217, %p218
      %p221 = scmp.ne.s32.totalorder %s204, %s220
      %p222 = scmp.eq.s32.totalorder %s23, 0
      %p223 = por %p221, %p222
      %p224 = scmp.le.s32.totalorder 1, %s17
      %p225 = scmp.lt.s32.totalorder %s17, 3
      %p226 = pnand %p224, %p225
      %p227 = pneg %p226
      // Predicated region
      $region9: #{vit_encoder.1} parent=5 // pred_check
        _
      $region10: #{vit_encoder.1} parent=5 // pred_check_branch
        %229 = sbr.rel (%p226) target = $region12
      $region11: #{vit_encoder.1} parent=5 // pred_region
        %s230 = ssub.s32 %s17, 1
        // Predicated region
        $region13: #{vit_encoder.1} parent=11 // pred_check
          %p231 = pneg %p64
        $region14: #{vit_encoder.1} parent=11 // pred_check_branch
          %233 = sbr.rel (%p231) target = $region16
        $region15: #{vit_encoder.1} parent=11 // pred_region
          _
        $region16: #{vit_encoder.1} parent=11 // pred_fallthru
          _
        // Predicated region
        $region17: #{vit_encoder.1} parent=11 // pred_check
          %p234 = pneg %p85
        $region18: #{vit_encoder.1} parent=11 // pred_check_branch
          %236 = sbr.rel (%p234) target = $region20
        $region19: #{vit_encoder.1} parent=11 // pred_region
          _
        $region20: #{vit_encoder.1} parent=11 // pred_fallthru
          _
        // Predicated region
        $region21: #{vit_encoder.1} parent=11 // pred_check
          %p237 = pneg %p106
        $region22: #{vit_encoder.1} parent=11 // pred_check_branch
          %239 = sbr.rel (%p237) target = $region24
        $region23: #{vit_encoder.1} parent=11 // pred_region
          _
        $region24: #{vit_encoder.1} parent=11 // pred_fallthru
          _
        // Predicated region
        $region25: #{vit_encoder.1} parent=11 // pred_check
          %p240 = pneg %p127
        $region26: #{vit_encoder.1} parent=11 // pred_check_branch
          %242 = sbr.rel (%p240) target = $region28
        $region27: #{vit_encoder.1} parent=11 // pred_region
          _
        $region28: #{vit_encoder.1} parent=11 // pred_fallthru
          _
        // Predicated region
        $region29: #{vit_encoder.1} parent=11 // pred_check
          %p243 = pneg %p148
        $region30: #{vit_encoder.1} parent=11 // pred_check_branch
          %245 = sbr.rel (%p243) target = $region32
        $region31: #{vit_encoder.1} parent=11 // pred_region
          _
        $region32: #{vit_encoder.1} parent=11 // pred_fallthru
          _
        // Predicated region
        $region33: #{vit_encoder.1} parent=11 // pred_check
          %p246 = pneg %p169
        $region34: #{vit_encoder.1} parent=11 // pred_check_branch
          %248 = sbr.rel (%p246) target = $region36
        $region35: #{vit_encoder.1} parent=11 // pred_region
          _
        $region36: #{vit_encoder.1} parent=11 // pred_fallthru
          _
        // Predicated region
        $region37: #{vit_encoder.1} parent=11 // pred_check
          %p249 = pneg %p190
        $region38: #{vit_encoder.1} parent=11 // pred_check_branch
          %251 = sbr.rel (%p249) target = $region40
        $region39: #{vit_encoder.1} parent=11 // pred_region
          _
        $region40: #{vit_encoder.1} parent=11 // pred_fallthru
          _
      $region12: #{vit_encoder.1} parent=5 // pred_fallthru
        _
      %p252 = scmp.lt.s32.totalorder %s17, 2
      // Predicated region
      $region41: #{vit_encoder.1} parent=5 // pred_check
        %p253 = pneg %p252
      $region42: #{vit_encoder.1} parent=5 // pred_check_branch
        %255 = sbr.rel (%p253) target = $region44
      $region43: #{vit_encoder.1} parent=5 // pred_region
        // Predicated region
        $region45: #{vit_encoder.1} parent=43 // pred_check
          %p256 = pneg %p37
        $region46: #{vit_encoder.1} parent=43 // pred_check_branch
          %258 = sbr.rel (%p256) target = $region48
        $region47: #{vit_encoder.1} parent=43 // pred_region
          %p259 = scmp.lt.s32.totalorder %s17, 1
          %s260 = scalar_select %p259, %s17, 1
          %s261 = smul.addr %s260, 8
          %s262 = scalar_lea.vmem %s0, %s261
        $region48: #{vit_encoder.1} parent=43 // pred_fallthru
          _
      $region44: #{vit_encoder.1} parent=5 // pred_fallthru
        _
      %p263 = scmp.le.s32.totalorder 1, %s17
      %p264 = scmp.lt.s32.totalorder %s17, 3
      %p265 = pnand %p263, %p264
      %p266 = pneg %p265
      // Predicated region
      $region49: #{vit_encoder.1} parent=5 // pred_check
        _
      $region50: #{vit_encoder.1} parent=5 // pred_check_branch
        %268 = sbr.rel (%p265) target = $region52
      $region51: #{vit_encoder.1} parent=5 // pred_region
        %s269 = ssub.s32 %s17, 1
        %p270 = scmp.lt.s32.totalorder %s22, 1
        %s271 = scalar_select %p270, %s22, 1
        %s272 = smul.addr %s271, 8
        %s273 = scalar_lea.vmem %s0, %s272
        %p274 = pneg %p43
        %p275 = pneg %p40
        %p276 = pneg %p64
        %p277 = pneg %p61
        %p278 = pneg %p85
        %p279 = pneg %p82
        %p280 = pneg %p106
        %p281 = pneg %p103
        %p282 = pneg %p127
        %p283 = pneg %p124
        %p284 = pneg %p148
        %p285 = pneg %p145
        %p286 = pneg %p169
        %p287 = pneg %p166
        %p288 = pneg %p190
        %p289 = pneg %p187
        %p290 = pneg %p216
        %p291 = pneg %p213
        %s292 = sand.u32 %s203, 1
        %s293 = scalar_lea.sflag [#allocation3], %s292
        %s294 = sand.u32 %s203, 1
        %s295 = smul.addr %s294, 8
        %s296 = scalar_lea.vmem [#allocation2], %s295
        %p297 = scmp.lt.s32.totalorder %s22, 1
        %s298 = scalar_select %p297, %s22, 1
        %s299 = smul.addr %s298, 8
        %s300 = scalar_lea.vmem %s0, %s299
        %v301 = vld [vmem:[%s300] sm:$0xff]
        %v302 = vld [vmem:[%s1] sm:$0x3f]
        %vm303 = vcmask 261120
        %v304 = vsel %vm303, %v301, 0.0
        %305 = vadd.xlane.f32.xlu0 %v304
        %v306 = vpop.xlane.xlu0 %305
        %v307 = vrcp.pop 32.0
        %v308 = vmul.f32 %v306, %v307
        %v309 = vsub.f32 %v301, %v308
        %v310 = vmul.f32 %v309, %v309
        %v311 = vsel %vm303, %v310, 0.0
        %312 = vadd.xlane.f32.xlu0 %v311
        %v313 = vpop.xlane.xlu0 %312
        %v314 = vmul.f32 %v313, %v307
        %v315 = vadd.f32 %v314, 1e-06
        %v316 = vrsqrt.pop %v315
        %v317 = vmul.f32 %v309, %v316
        %v318 = vlaneseq
        %v319 = vshrl.u32 %v318, 7
        %v320 = vsub.s32 0, %v319
        %v321 = vrot.slane %v302, %v320
        %v322 = vmul.f32 %v317, %v321
        %v323 = vlaneseq
        %v324 = vshrl.u32 %v323, 7
        %v325 = vsub.s32 1, %v324
        %v326 = vrot.slane %v302, %v325
        %v327 = vadd.f32 %v322, %v326
        %v328 = vld [vmem:[%s2] sm:$0xff]
        %v329 = vld [vmem:[%s2 + $0x8] sm:$0xff]
        %v330 = vld [vmem:[%s2 + $0x10] sm:$0xff]
        %v331 = vld [vmem:[%s2 + $0x18] sm:$0xff]
        %v332 = vld [vmem:[%s3] sm:$0x1]
        %v334 = vlaneseq
        %v335 = vshrl.u32 %v334, 7
        %v336 = vsub.s32 0, %v335
        %v337 = vrot.slane %v332, %v336
        %v340 = vsel %vm303, %v327, 0
        %342 = vmatprep.subr.mxu0 0.0
        %343 = vmatpush1.msra.mxu0 %v328
        %344 = vmatprep.subr.mxu0 0.0
        %345 = vmatpush1.msra.mxu0 %v329
        %346 = vmatprep.subr.mxu0 0.0
        %347 = vmatpush1.msra.mxu0 %v330
        %348 = vmatprep.subr.mxu0 0.0
        %349 = vmatpush1.msra.mxu0 %v331
        %350 = vmatprep.subr.mxu0 0.0
        %351 = vmatpush1.msra.mxu0 0.0
        %352 = vmatprep.subr.mxu0 0.0
        %353 = vmatpush1.msra.mxu0 0.0
        %354 = vmatprep.subr.mxu0 0.0
        %355 = vmatpush1.msra.mxu0 0.0
        %356 = vmatprep.subr.mxu0 0.0
        %357 = vmatpush1.msra.mxu0 0.0
        %358 = vmatprep.subr.mxu0 0.0
        %359 = vmatpush1.msra.mxu0 0.0
        %360 = vmatprep.subr.mxu0 0.0
        %361 = vmatpush1.msra.mxu0 0.0
        %362 = vmatprep.subr.mxu0 0.0
        %363 = vmatpush1.msra.mxu0 0.0
        %364 = vmatprep.subr.mxu0 0.0
        %365 = vmatpush1.msra.mxu0 0.0
        %366 = vmatprep.subr.mxu0 0.0
        %367 = vmatpush1.msra.mxu0 0.0
        %368 = vmatprep.subr.mxu0 0.0
        %369 = vmatpush1.msra.mxu0 0.0
        %370 = vmatprep.subr.mxu0 0.0
        %371 = vmatpush1.msra.mxu0 0.0
        %372 = vmatprep.subr.mxu0 0.0
        %373 = vmatpush1.msra.mxu0 0.0
        %374 = vmatprep.subr.mxu0 0.0
        %375 = vmatpush1.msra.mxu0 0.0
        %376 = vmatprep.subr.mxu0 0.0
        %377 = vmatpush1.msra.mxu0 0.0
        %378 = vmatprep.subr.mxu0 0.0
        %379 = vmatpush1.msra.mxu0 0.0
        %380 = vmatprep.subr.mxu0 0.0
        %381 = vmatpush1.msra.mxu0 0.0
        %382 = vmatprep.subr.mxu0 0.0
        %383 = vmatpush1.msra.mxu0 0.0
        %384 = vmatprep.subr.mxu0 0.0
        %385 = vmatpush1.msra.mxu0 0.0
        %386 = vmatprep.subr.mxu0 0.0
        %387 = vmatpush1.msra.mxu0 0.0
        %388 = vmatprep.subr.mxu0 0.0
        %389 = vmatpush1.msra.mxu0 0.0
        %390 = vmatprep.subr.mxu0 0.0
        %391 = vmatpush1.msra.mxu0 0.0
        %392 = vmatprep.subr.mxu0 0.0
        %393 = vmatpush1.msra.mxu0 0.0
        %394 = vmatprep.subr.mxu0 0.0
        %395 = vmatpush1.msra.mxu0 0.0
        %396 = vmatprep.subr.mxu0 0.0
        %397 = vmatpush1.msra.mxu0 0.0
        %398 = vmatprep.subr.mxu0 0.0
        %399 = vmatpush1.msra.mxu0 0.0
        %400 = vmatprep.subr.mxu0 0.0
        %401 = vmatpush1.msra.mxu0 0.0
        %402 = vmatprep.subr.mxu0 0.0
        %403 = vmatpush1.msra.mxu0 0.0
        %404 = vmatprep.subr.mxu0 0.0
        %405 = vmatpush1.msra.mxu0 0.0
        %406 = vmatprep.mubr.f32.mxu0 0.0
        %407 = vmatmul.mubr.f32.gmra.mrb[0].mxu0 %v340
        %v408 = vpop.f32.mrb[0].mxu0
        %v409 = vadd.f32 %v337, %v408
        %v410 = vpop.f32.mrb[0].mxu0
        %411 = vdwg.mxu0
        %413 = vrot.lane.b32.xlu0 %v409, 120
        %v414 = vpop.permute.xlu0 %413
        %415 = vrot.lane.b32.xlu0 %v409, 112
        %v416 = vpop.permute.xlu0 %415
        %417 = vrot.lane.b32.xlu0 %v409, 104
        %v418 = vpop.permute.xlu0 %417
        %419 = vrot.lane.b32.xlu0 %v409, 96
        %v420 = vpop.permute.xlu0 %419
        %vm421 = vcmask 64512
        %v422 = vsel %vm421, %v409, 0
        %v424 = vsel %vm421, %v420, 0
        %426 = vmatprep.subr.mxu0 0.0
        %427 = vmatpush1.xpose.msra.mxu0 %v424
        %428 = vmatprep.subr.mxu0 0.0
        %429 = vmatpush1.xpose.msra.mxu0 0.0
        %430 = vmatprep.subr.mxu0 0.0
        %431 = vmatpush1.xpose.msra.mxu0 0.0
        %432 = vmatprep.subr.mxu0 0.0
        %433 = vmatpush1.xpose.msra.mxu0 0.0
        %434 = vmatprep.subr.mxu0 0.0
        %435 = vmatpush1.xpose.msra.mxu0 0.0
        %436 = vmatprep.subr.mxu0 0.0
        %437 = vmatpush1.xpose.msra.mxu0 0.0
        %438 = vmatprep.subr.mxu0 0.0
        %439 = vmatpush1.xpose.msra.mxu0 0.0
        %440 = vmatprep.subr.mxu0 0.0
        %441 = vmatpush1.xpose.msra.mxu0 0.0
        %442 = vmatprep.subr.mxu0 0.0
        %443 = vmatpush1.xpose.msra.mxu0 0.0
        %444 = vmatprep.subr.mxu0 0.0
        %445 = vmatpush1.xpose.msra.mxu0 0.0
        %446 = vmatprep.subr.mxu0 0.0
        %447 = vmatpush1.xpose.msra.mxu0 0.0
        %448 = vmatprep.subr.mxu0 0.0
        %449 = vmatpush1.xpose.msra.mxu0 0.0
        %450 = vmatprep.subr.mxu0 0.0
        %451 = vmatpush1.xpose.msra.mxu0 0.0
        %452 = vmatprep.subr.mxu0 0.0
        %453 = vmatpush1.xpose.msra.mxu0 0.0
        %454 = vmatprep.subr.mxu0 0.0
        %455 = vmatpush1.xpose.msra.mxu0 0.0
        %456 = vmatprep.subr.mxu0 0.0
        %457 = vmatpush1.xpose.msra.mxu0 0.0
        %458 = vmatprep.subr.mxu0 0.0
        %459 = vmatpush1.xpose.msra.mxu0 0.0
        %460 = vmatprep.subr.mxu0 0.0
        %461 = vmatpush1.xpose.msra.mxu0 0.0
        %462 = vmatprep.subr.mxu0 0.0
        %463 = vmatpush1.xpose.msra.mxu0 0.0
        %464 = vmatprep.subr.mxu0 0.0
        %465 = vmatpush1.xpose.msra.mxu0 0.0
        %466 = vmatprep.subr.mxu0 0.0
        %467 = vmatpush1.xpose.msra.mxu0 0.0
        %468 = vmatprep.subr.mxu0 0.0
        %469 = vmatpush1.xpose.msra.mxu0 0.0
        %470 = vmatprep.subr.mxu0 0.0
        %471 = vmatpush1.xpose.msra.mxu0 0.0
        %472 = vmatprep.subr.mxu0 0.0
        %473 = vmatpush1.xpose.msra.mxu0 0.0
        %474 = vmatprep.subr.mxu0 0.0
        %475 = vmatpush1.xpose.msra.mxu0 0.0
        %476 = vmatprep.subr.mxu0 0.0
        %477 = vmatpush1.xpose.msra.mxu0 0.0
        %478 = vmatprep.subr.mxu0 0.0
        %479 = vmatpush1.xpose.msra.mxu0 0.0
        %480 = vmatprep.subr.mxu0 0.0
        %481 = vmatpush1.xpose.msra.mxu0 0.0
        %482 = vmatprep.subr.mxu0 0.0
        %483 = vmatpush1.xpose.msra.mxu0 0.0
        %484 = vmatprep.subr.mxu0 0.0
        %485 = vmatpush1.xpose.msra.mxu0 0.0
        %486 = vmatprep.subr.mxu0 0.0
        %487 = vmatpush1.xpose.msra.mxu0 0.0
        %488 = vmatprep.subr.mxu0 0.0
        %489 = vmatpush1.xpose.msra.mxu0 0.0
        %490 = vmatprep.mubr.f32.mxu0 0.0
        %491 = vmatmul.mubr.f32.gmra.mrb[0].mxu0 %v422
        %v492 = vpop.f32.mrb[0].mxu0
        %v493 = vadd.f32 0.0, %v492
        %v494 = vpop.f32.mrb[0].mxu0
        %495 = vdwg.mxu0
        %496 = vrot.lane.b32.xlu0 %v414, 96
        %v497 = vpop.permute.xlu0 %496
        %v498 = vsel %vm421, %v414, 0
        %v500 = vsel %vm421, %v497, 0
        %502 = vmatprep.subr.mxu0 0.0
        %503 = vmatpush1.xpose.msra.mxu0 %v500
        %504 = vmatprep.subr.mxu0 0.0
        %505 = vmatpush1.xpose.msra.mxu0 0.0
        %506 = vmatprep.subr.mxu0 0.0
        %507 = vmatpush1.xpose.msra.mxu0 0.0
        %508 = vmatprep.subr.mxu0 0.0
        %509 = vmatpush1.xpose.msra.mxu0 0.0
        %510 = vmatprep.subr.mxu0 0.0
        %511 = vmatpush1.xpose.msra.mxu0 0.0
        %512 = vmatprep.subr.mxu0 0.0
        %513 = vmatpush1.xpose.msra.mxu0 0.0
        %514 = vmatprep.subr.mxu0 0.0
        %515 = vmatpush1.xpose.msra.mxu0 0.0
        %516 = vmatprep.subr.mxu0 0.0
        %517 = vmatpush1.xpose.msra.mxu0 0.0
        %518 = vmatprep.subr.mxu0 0.0
        %519 = vmatpush1.xpose.msra.mxu0 0.0
        %520 = vmatprep.subr.mxu0 0.0
        %521 = vmatpush1.xpose.msra.mxu0 0.0
        %522 = vmatprep.subr.mxu0 0.0
        %523 = vmatpush1.xpose.msra.mxu0 0.0
        %524 = vmatprep.subr.mxu0 0.0
        %525 = vmatpush1.xpose.msra.mxu0 0.0
        %526 = vmatprep.subr.mxu0 0.0
        %527 = vmatpush1.xpose.msra.mxu0 0.0
        %528 = vmatprep.subr.mxu0 0.0
        %529 = vmatpush1.xpose.msra.mxu0 0.0
        %530 = vmatprep.subr.mxu0 0.0
        %531 = vmatpush1.xpose.msra.mxu0 0.0
        %532 = vmatprep.subr.mxu0 0.0
        %533 = vmatpush1.xpose.msra.mxu0 0.0
        %534 = vmatprep.subr.mxu0 0.0
        %535 = vmatpush1.xpose.msra.mxu0 0.0
        %536 = vmatprep.subr.mxu0 0.0
        %537 = vmatpush1.xpose.msra.mxu0 0.0
        %538 = vmatprep.subr.mxu0 0.0
        %539 = vmatpush1.xpose.msra.mxu0 0.0
        %540 = vmatprep.subr.mxu0 0.0
        %541 = vmatpush1.xpose.msra.mxu0 0.0
        %542 = vmatprep.subr.mxu0 0.0
        %543 = vmatpush1.xpose.msra.mxu0 0.0
        %544 = vmatprep.subr.mxu0 0.0
        %545 = vmatpush1.xpose.msra.mxu0 0.0
        %546 = vmatprep.subr.mxu0 0.0
        %547 = vmatpush1.xpose.msra.mxu0 0.0
        %548 = vmatprep.subr.mxu0 0.0
        %549 = vmatpush1.xpose.msra.mxu0 0.0
        %550 = vmatprep.subr.mxu0 0.0
        %551 = vmatpush1.xpose.msra.mxu0 0.0
        %552 = vmatprep.subr.mxu0 0.0
        %553 = vmatpush1.xpose.msra.mxu0 0.0
        %554 = vmatprep.subr.mxu0 0.0
        %555 = vmatpush1.xpose.msra.mxu0 0.0
        %556 = vmatprep.subr.mxu0 0.0
        %557 = vmatpush1.xpose.msra.mxu0 0.0
        %558 = vmatprep.subr.mxu0 0.0
        %559 = vmatpush1.xpose.msra.mxu0 0.0
        %560 = vmatprep.subr.mxu0 0.0
        %561 = vmatpush1.xpose.msra.mxu0 0.0
        %562 = vmatprep.subr.mxu0 0.0
        %563 = vmatpush1.xpose.msra.mxu0 0.0
        %564 = vmatprep.subr.mxu0 0.0
        %565 = vmatpush1.xpose.msra.mxu0 0.0
        %566 = vmatprep.mubr.f32.mxu0 0.0
        %567 = vmatmul.mubr.f32.gmra.mrb[0].mxu0 %v498
        %v568 = vpop.f32.mrb[0].mxu0
        %v569 = vadd.f32 0.0, %v568
        %v570 = vpop.f32.mrb[0].mxu0
        %571 = vdwg.mxu0
        %572 = vrot.lane.b32.xlu0 %v416, 96
        %v573 = vpop.permute.xlu0 %572
        %v574 = vsel %vm421, %v416, 0
        %v576 = vsel %vm421, %v573, 0
        %578 = vmatprep.subr.mxu0 0.0
        %579 = vmatpush1.xpose.msra.mxu0 %v576
        %580 = vmatprep.subr.mxu0 0.0
        %581 = vmatpush1.xpose.msra.mxu0 0.0
        %582 = vmatprep.subr.mxu0 0.0
        %583 = vmatpush1.xpose.msra.mxu0 0.0
        %584 = vmatprep.subr.mxu0 0.0
        %585 = vmatpush1.xpose.msra.mxu0 0.0
        %586 = vmatprep.subr.mxu0 0.0
        %587 = vmatpush1.xpose.msra.mxu0 0.0
        %588 = vmatprep.subr.mxu0 0.0
        %589 = vmatpush1.xpose.msra.mxu0 0.0
        %590 = vmatprep.subr.mxu0 0.0
        %591 = vmatpush1.xpose.msra.mxu0 0.0
        %592 = vmatprep.subr.mxu0 0.0
        %593 = vmatpush1.xpose.msra.mxu0 0.0
        %594 = vmatprep.subr.mxu0 0.0
        %595 = vmatpush1.xpose.msra.mxu0 0.0
        %596 = vmatprep.subr.mxu0 0.0
        %597 = vmatpush1.xpose.msra.mxu0 0.0
        %598 = vmatprep.subr.mxu0 0.0
        %599 = vmatpush1.xpose.msra.mxu0 0.0
        %600 = vmatprep.subr.mxu0 0.0
        %601 = vmatpush1.xpose.msra.mxu0 0.0
        %602 = vmatprep.subr.mxu0 0.0
        %603 = vmatpush1.xpose.msra.mxu0 0.0
        %604 = vmatprep.subr.mxu0 0.0
        %605 = vmatpush1.xpose.msra.mxu0 0.0
        %606 = vmatprep.subr.mxu0 0.0
        %607 = vmatpush1.xpose.msra.mxu0 0.0
        %608 = vmatprep.subr.mxu0 0.0
        %609 = vmatpush1.xpose.msra.mxu0 0.0
        %610 = vmatprep.subr.mxu0 0.0
        %611 = vmatpush1.xpose.msra.mxu0 0.0
        %612 = vmatprep.subr.mxu0 0.0
        %613 = vmatpush1.xpose.msra.mxu0 0.0
        %614 = vmatprep.subr.mxu0 0.0
        %615 = vmatpush1.xpose.msra.mxu0 0.0
        %616 = vmatprep.subr.mxu0 0.0
        %617 = vmatpush1.xpose.msra.mxu0 0.0
        %618 = vmatprep.subr.mxu0 0.0
        %619 = vmatpush1.xpose.msra.mxu0 0.0
        %620 = vmatprep.subr.mxu0 0.0
        %621 = vmatpush1.xpose.msra.mxu0 0.0
        %622 = vmatprep.subr.mxu0 0.0
        %623 = vmatpush1.xpose.msra.mxu0 0.0
        %624 = vmatprep.subr.mxu0 0.0
        %625 = vmatpush1.xpose.msra.mxu0 0.0
        %626 = vmatprep.subr.mxu0 0.0
        %627 = vmatpush1.xpose.msra.mxu0 0.0
        %628 = vmatprep.subr.mxu0 0.0
        %629 = vmatpush1.xpose.msra.mxu0 0.0
        %630 = vmatprep.subr.mxu0 0.0
        %631 = vmatpush1.xpose.msra.mxu0 0.0
        %632 = vmatprep.subr.mxu0 0.0
        %633 = vmatpush1.xpose.msra.mxu0 0.0
        %634 = vmatprep.subr.mxu0 0.0
        %635 = vmatpush1.xpose.msra.mxu0 0.0
        %636 = vmatprep.subr.mxu0 0.0
        %637 = vmatpush1.xpose.msra.mxu0 0.0
        %638 = vmatprep.subr.mxu0 0.0
        %639 = vmatpush1.xpose.msra.mxu0 0.0
        %640 = vmatprep.subr.mxu0 0.0
        %641 = vmatpush1.xpose.msra.mxu0 0.0
        %642 = vmatprep.mubr.f32.mxu0 0.0
        %643 = vmatmul.mubr.f32.gmra.mrb[0].mxu0 %v574
        %v644 = vpop.f32.mrb[0].mxu0
        %v645 = vadd.f32 0.0, %v644
        %v646 = vpop.f32.mrb[0].mxu0
        %647 = vdwg.mxu0
        %648 = vrot.lane.b32.xlu0 %v418, 96
        %v649 = vpop.permute.xlu0 %648
        %v650 = vsel %vm421, %v418, 0
        %v652 = vsel %vm421, %v649, 0
        %654 = vmatprep.subr.mxu0 0.0
        %655 = vmatpush1.xpose.msra.mxu0 %v652
        %656 = vmatprep.subr.mxu0 0.0
        %657 = vmatpush1.xpose.msra.mxu0 0.0
        %658 = vmatprep.subr.mxu0 0.0
        %659 = vmatpush1.xpose.msra.mxu0 0.0
        %660 = vmatprep.subr.mxu0 0.0
        %661 = vmatpush1.xpose.msra.mxu0 0.0
        %662 = vmatprep.subr.mxu0 0.0
        %663 = vmatpush1.xpose.msra.mxu0 0.0
        %664 = vmatprep.subr.mxu0 0.0
        %665 = vmatpush1.xpose.msra.mxu0 0.0
        %666 = vmatprep.subr.mxu0 0.0
        %667 = vmatpush1.xpose.msra.mxu0 0.0
        %668 = vmatprep.subr.mxu0 0.0
        %669 = vmatpush1.xpose.msra.mxu0 0.0
        %670 = vmatprep.subr.mxu0 0.0
        %671 = vmatpush1.xpose.msra.mxu0 0.0
        %672 = vmatprep.subr.mxu0 0.0
        %673 = vmatpush1.xpose.msra.mxu0 0.0
        %674 = vmatprep.subr.mxu0 0.0
        %675 = vmatpush1.xpose.msra.mxu0 0.0
        %676 = vmatprep.subr.mxu0 0.0
        %677 = vmatpush1.xpose.msra.mxu0 0.0
        %678 = vmatprep.subr.mxu0 0.0
        %679 = vmatpush1.xpose.msra.mxu0 0.0
        %680 = vmatprep.subr.mxu0 0.0
        %681 = vmatpush1.xpose.msra.mxu0 0.0
        %682 = vmatprep.subr.mxu0 0.0
        %683 = vmatpush1.xpose.msra.mxu0 0.0
        %684 = vmatprep.subr.mxu0 0.0
        %685 = vmatpush1.xpose.msra.mxu0 0.0
        %686 = vmatprep.subr.mxu0 0.0
        %687 = vmatpush1.xpose.msra.mxu0 0.0
        %688 = vmatprep.subr.mxu0 0.0
        %689 = vmatpush1.xpose.msra.mxu0 0.0
        %690 = vmatprep.subr.mxu0 0.0
        %691 = vmatpush1.xpose.msra.mxu0 0.0
        %692 = vmatprep.subr.mxu0 0.0
        %693 = vmatpush1.xpose.msra.mxu0 0.0
        %694 = vmatprep.subr.mxu0 0.0
        %695 = vmatpush1.xpose.msra.mxu0 0.0
        %696 = vmatprep.subr.mxu0 0.0
        %697 = vmatpush1.xpose.msra.mxu0 0.0
        %698 = vmatprep.subr.mxu0 0.0
        %699 = vmatpush1.xpose.msra.mxu0 0.0
        %700 = vmatprep.subr.mxu0 0.0
        %701 = vmatpush1.xpose.msra.mxu0 0.0
        %702 = vmatprep.subr.mxu0 0.0
        %703 = vmatpush1.xpose.msra.mxu0 0.0
        %704 = vmatprep.subr.mxu0 0.0
        %705 = vmatpush1.xpose.msra.mxu0 0.0
        %706 = vmatprep.subr.mxu0 0.0
        %707 = vmatpush1.xpose.msra.mxu0 0.0
        %708 = vmatprep.subr.mxu0 0.0
        %709 = vmatpush1.xpose.msra.mxu0 0.0
        %710 = vmatprep.subr.mxu0 0.0
        %711 = vmatpush1.xpose.msra.mxu0 0.0
        %712 = vmatprep.subr.mxu0 0.0
        %713 = vmatpush1.xpose.msra.mxu0 0.0
        %714 = vmatprep.subr.mxu0 0.0
        %715 = vmatpush1.xpose.msra.mxu0 0.0
        %716 = vmatprep.subr.mxu0 0.0
        %717 = vmatpush1.xpose.msra.mxu0 0.0
        %718 = vmatprep.mubr.f32.mxu0 0.0
        %719 = vmatmul.mubr.f32.gmra.mrb[0].mxu0 %v650
        %v720 = vpop.f32.mrb[0].mxu0
        %v721 = vadd.f32 0.0, %v720
        %v722 = vpop.f32.mrb[0].mxu0
        %723 = vdwg.mxu0
        %v724 = vsel %vm421, %v493, -inf
        %725 = vmax.xlane.f32.xlu0 %v724
        %v726 = vpop.xlane.xlu0 %725
        %v727 = vsel %vm421, %v569, -inf
        %728 = vmax.xlane.f32.xlu0 %v727
        %v729 = vpop.xlane.xlu0 %728
        %v730 = vsel %vm421, %v645, -inf
        %731 = vmax.xlane.f32.xlu0 %v730
        %v732 = vpop.xlane.xlu0 %731
        %v733 = vsel %vm421, %v721, -inf
        %734 = vmax.xlane.f32.xlu0 %v733
        %v735 = vpop.xlane.xlu0 %734
        %v736 = vsub.f32 %v493, %v726
        %v737 = vsub.f32 %v569, %v729
        %v738 = vsub.f32 %v645, %v732
        %v739 = vsub.f32 %v721, %v735
        %v740 = vmul.f32 %v736, 1.442695
        %v741 = vpow.pop %v740
        %v742 = vmul.f32 %v737, 1.442695
        %v743 = vpow.pop %v742
        %v744 = vmul.f32 %v738, 1.442695
        %v745 = vpow.pop %v744
        %v746 = vmul.f32 %v739, 1.442695
        %v747 = vpow.pop %v746
        %v748 = vsel %vm421, %v741, 0.0
        %749 = vadd.xlane.f32.xlu0 %v748
        %v750 = vpop.xlane.xlu0 %749
        %v751 = vsel %vm421, %v743, 0.0
        %752 = vadd.xlane.f32.xlu0 %v751
        %v753 = vpop.xlane.xlu0 %752
        %v754 = vsel %vm421, %v745, 0.0
        %755 = vadd.xlane.f32.xlu0 %v754
        %v756 = vpop.xlane.xlu0 %755
        %v757 = vsel %vm421, %v747, 0.0
        %758 = vadd.xlane.f32.xlu0 %v757
        %v759 = vpop.xlane.xlu0 %758
        %v760 = vrcp.pop %v750
        %v761 = vrcp.pop %v753
        %v762 = vrcp.pop %v756
        %v763 = vrcp.pop %v759
        %v764 = vmul.f32 %v741, %v760
        %v765 = vmul.f32 %v743, %v761
        %v766 = vmul.f32 %v745, %v762
        %v767 = vmul.f32 %v747, %v763
        %768 = vrot.lane.b32.xlu0 %v409, 64
        %v769 = vpop.permute.xlu0 %768
        %v772 = vsel %vm421, %v764, 0
        %774 = vmatprep.subr.mxu0 0.0
        %775 = vmatpush1.msra.mxu0 %v769
        %776 = vmatprep.subr.mxu0 0.0
        %777 = vmatpush1.msra.mxu0 0.0
        %778 = vmatprep.subr.mxu0 0.0
        %779 = vmatpush1.msra.mxu0 0.0
        %780 = vmatprep.subr.mxu0 0.0
        %781 = vmatpush1.msra.mxu0 0.0
        %782 = vmatprep.subr.mxu0 0.0
        %783 = vmatpush1.msra.mxu0 0.0
        %784 = vmatprep.subr.mxu0 0.0
        %785 = vmatpush1.msra.mxu0 0.0
        %786 = vmatprep.subr.mxu0 0.0
        %787 = vmatpush1.msra.mxu0 0.0
        %788 = vmatprep.subr.mxu0 0.0
        %789 = vmatpush1.msra.mxu0 0.0
        %790 = vmatprep.subr.mxu0 0.0
        %791 = vmatpush1.msra.mxu0 0.0
        %792 = vmatprep.subr.mxu0 0.0
        %793 = vmatpush1.msra.mxu0 0.0
        %794 = vmatprep.subr.mxu0 0.0
        %795 = vmatpush1.msra.mxu0 0.0
        %796 = vmatprep.subr.mxu0 0.0
        %797 = vmatpush1.msra.mxu0 0.0
        %798 = vmatprep.subr.mxu0 0.0
        %799 = vmatpush1.msra.mxu0 0.0
        %800 = vmatprep.subr.mxu0 0.0
        %801 = vmatpush1.msra.mxu0 0.0
        %802 = vmatprep.subr.mxu0 0.0
        %803 = vmatpush1.msra.mxu0 0.0
        %804 = vmatprep.subr.mxu0 0.0
        %805 = vmatpush1.msra.mxu0 0.0
        %806 = vmatprep.subr.mxu0 0.0
        %807 = vmatpush1.msra.mxu0 0.0
        %808 = vmatprep.subr.mxu0 0.0
        %809 = vmatpush1.msra.mxu0 0.0
        %810 = vmatprep.subr.mxu0 0.0
        %811 = vmatpush1.msra.mxu0 0.0
        %812 = vmatprep.subr.mxu0 0.0
        %813 = vmatpush1.msra.mxu0 0.0
        %814 = vmatprep.subr.mxu0 0.0
        %815 = vmatpush1.msra.mxu0 0.0
        %816 = vmatprep.subr.mxu0 0.0
        %817 = vmatpush1.msra.mxu0 0.0
        %818 = vmatprep.subr.mxu0 0.0
        %819 = vmatpush1.msra.mxu0 0.0
        %820 = vmatprep.subr.mxu0 0.0
        %821 = vmatpush1.msra.mxu0 0.0
        %822 = vmatprep.subr.mxu0 0.0
        %823 = vmatpush1.msra.mxu0 0.0
        %824 = vmatprep.subr.mxu0 0.0
        %825 = vmatpush1.msra.mxu0 0.0
        %826 = vmatprep.subr.mxu0 0.0
        %827 = vmatpush1.msra.mxu0 0.0
        %828 = vmatprep.subr.mxu0 0.0
        %829 = vmatpush1.msra.mxu0 0.0
        %830 = vmatprep.subr.mxu0 0.0
        %831 = vmatpush1.msra.mxu0 0.0
        %832 = vmatprep.subr.mxu0 0.0
        %833 = vmatpush1.msra.mxu0 0.0
        %834 = vmatprep.subr.mxu0 0.0
        %835 = vmatpush1.msra.mxu0 0.0
        %836 = vmatprep.subr.mxu0 0.0
        %837 = vmatpush1.msra.mxu0 0.0
        %838 = vmatprep.mubr.f32.mxu0 0.0
        %839 = vmatmul.mubr.f32.gmra.mrb[0].mxu0 %v772
        %v840 = vpop.f32.mrb[0].mxu0
        %v841 = vadd.f32 0.0, %v840
        %v842 = vpop.f32.mrb[0].mxu0
        %843 = vdwg.mxu0
        %844 = vrot.lane.b32.xlu0 %v414, 64
        %v845 = vpop.permute.xlu0 %844
        %v848 = vsel %vm421, %v765, 0
        %850 = vmatprep.subr.mxu0 0.0
        %851 = vmatpush1.msra.mxu0 %v845
        %852 = vmatprep.subr.mxu0 0.0
        %853 = vmatpush1.msra.mxu0 0.0
        %854 = vmatprep.subr.mxu0 0.0
        %855 = vmatpush1.msra.mxu0 0.0
        %856 = vmatprep.subr.mxu0 0.0
        %857 = vmatpush1.msra.mxu0 0.0
        %858 = vmatprep.subr.mxu0 0.0
        %859 = vmatpush1.msra.mxu0 0.0
        %860 = vmatprep.subr.mxu0 0.0
        %861 = vmatpush1.msra.mxu0 0.0
        %862 = vmatprep.subr.mxu0 0.0
        %863 = vmatpush1.msra.mxu0 0.0
        %864 = vmatprep.subr.mxu0 0.0
        %865 = vmatpush1.msra.mxu0 0.0
        %866 = vmatprep.subr.mxu0 0.0
        %867 = vmatpush1.msra.mxu0 0.0
        %868 = vmatprep.subr.mxu0 0.0
        %869 = vmatpush1.msra.mxu0 0.0
        %870 = vmatprep.subr.mxu0 0.0
        %871 = vmatpush1.msra.mxu0 0.0
        %872 = vmatprep.subr.mxu0 0.0
        %873 = vmatpush1.msra.mxu0 0.0
        %874 = vmatprep.subr.mxu0 0.0
        %875 = vmatpush1.msra.mxu0 0.0
        %876 = vmatprep.subr.mxu0 0.0
        %877 = vmatpush1.msra.mxu0 0.0
        %878 = vmatprep.subr.mxu0 0.0
        %879 = vmatpush1.msra.mxu0 0.0
        %880 = vmatprep.subr.mxu0 0.0
        %881 = vmatpush1.msra.mxu0 0.0
        %882 = vmatprep.subr.mxu0 0.0
        %883 = vmatpush1.msra.mxu0 0.0
        %884 = vmatprep.subr.mxu0 0.0
        %885 = vmatpush1.msra.mxu0 0.0
        %886 = vmatprep.subr.mxu0 0.0
        %887 = vmatpush1.msra.mxu0 0.0
        %888 = vmatprep.subr.mxu0 0.0
        %889 = vmatpush1.msra.mxu0 0.0
        %890 = vmatprep.subr.mxu0 0.0
        %891 = vmatpush1.msra.mxu0 0.0
        %892 = vmatprep.subr.mxu0 0.0
        %893 = vmatpush1.msra.mxu0 0.0
        %894 = vmatprep.subr.mxu0 0.0
        %895 = vmatpush1.msra.mxu0 0.0
        %896 = vmatprep.subr.mxu0 0.0
        %897 = vmatpush1.msra.mxu0 0.0
        %898 = vmatprep.subr.mxu0 0.0
        %899 = vmatpush1.msra.mxu0 0.0
        %900 = vmatprep.subr.mxu0 0.0
        %901 = vmatpush1.msra.mxu0 0.0
        %902 = vmatprep.subr.mxu0 0.0
        %903 = vmatpush1.msra.mxu0 0.0
        %904 = vmatprep.subr.mxu0 0.0
        %905 = vmatpush1.msra.mxu0 0.0
        %906 = vmatprep.subr.mxu0 0.0
        %907 = vmatpush1.msra.mxu0 0.0
        %908 = vmatprep.subr.mxu0 0.0
        %909 = vmatpush1.msra.mxu0 0.0
        %910 = vmatprep.subr.mxu0 0.0
        %911 = vmatpush1.msra.mxu0 0.0
        %912 = vmatprep.subr.mxu0 0.0
        %913 = vmatpush1.msra.mxu0 0.0
        %914 = vmatprep.mubr.f32.mxu0 0.0
        %915 = vmatmul.mubr.f32.gmra.mrb[0].mxu0 %v848
        %v916 = vpop.f32.mrb[0].mxu0
        %v917 = vadd.f32 0.0, %v916
        %v918 = vpop.f32.mrb[0].mxu0
        %919 = vdwg.mxu0
        %920 = vrot.lane.b32.xlu0 %v416, 64
        %v921 = vpop.permute.xlu0 %920
        %v924 = vsel %vm421, %v766, 0
        %926 = vmatprep.subr.mxu0 0.0
        %927 = vmatpush1.msra.mxu0 %v921
        %928 = vmatprep.subr.mxu0 0.0
        %929 = vmatpush1.msra.mxu0 0.0
        %930 = vmatprep.subr.mxu0 0.0
        %931 = vmatpush1.msra.mxu0 0.0
        %932 = vmatprep.subr.mxu0 0.0
        %933 = vmatpush1.msra.mxu0 0.0
        %934 = vmatprep.subr.mxu0 0.0
        %935 = vmatpush1.msra.mxu0 0.0
        %936 = vmatprep.subr.mxu0 0.0
        %937 = vmatpush1.msra.mxu0 0.0
        %938 = vmatprep.subr.mxu0 0.0
        %939 = vmatpush1.msra.mxu0 0.0
        %940 = vmatprep.subr.mxu0 0.0
        %941 = vmatpush1.msra.mxu0 0.0
        %942 = vmatprep.subr.mxu0 0.0
        %943 = vmatpush1.msra.mxu0 0.0
        %944 = vmatprep.subr.mxu0 0.0
        %945 = vmatpush1.msra.mxu0 0.0
        %946 = vmatprep.subr.mxu0 0.0
        %947 = vmatpush1.msra.mxu0 0.0
        %948 = vmatprep.subr.mxu0 0.0
        %949 = vmatpush1.msra.mxu0 0.0
        %950 = vmatprep.subr.mxu0 0.0
        %951 = vmatpush1.msra.mxu0 0.0
        %952 = vmatprep.subr.mxu0 0.0
        %953 = vmatpush1.msra.mxu0 0.0
        %954 = vmatprep.subr.mxu0 0.0
        %955 = vmatpush1.msra.mxu0 0.0
        %956 = vmatprep.subr.mxu0 0.0
        %957 = vmatpush1.msra.mxu0 0.0
        %958 = vmatprep.subr.mxu0 0.0
        %959 = vmatpush1.msra.mxu0 0.0
        %960 = vmatprep.subr.mxu0 0.0
        %961 = vmatpush1.msra.mxu0 0.0
        %962 = vmatprep.subr.mxu0 0.0
        %963 = vmatpush1.msra.mxu0 0.0
        %964 = vmatprep.subr.mxu0 0.0
        %965 = vmatpush1.msra.mxu0 0.0
        %966 = vmatprep.subr.mxu0 0.0
        %967 = vmatpush1.msra.mxu0 0.0
        %968 = vmatprep.subr.mxu0 0.0
        %969 = vmatpush1.msra.mxu0 0.0
        %970 = vmatprep.subr.mxu0 0.0
        %971 = vmatpush1.msra.mxu0 0.0
        %972 = vmatprep.subr.mxu0 0.0
        %973 = vmatpush1.msra.mxu0 0.0
        %974 = vmatprep.subr.mxu0 0.0
        %975 = vmatpush1.msra.mxu0 0.0
        %976 = vmatprep.subr.mxu0 0.0
        %977 = vmatpush1.msra.mxu0 0.0
        %978 = vmatprep.subr.mxu0 0.0
        %979 = vmatpush1.msra.mxu0 0.0
        %980 = vmatprep.subr.mxu0 0.0
        %981 = vmatpush1.msra.mxu0 0.0
        %982 = vmatprep.subr.mxu0 0.0
        %983 = vmatpush1.msra.mxu0 0.0
        %984 = vmatprep.subr.mxu0 0.0
        %985 = vmatpush1.msra.mxu0 0.0
        %986 = vmatprep.subr.mxu0 0.0
        %987 = vmatpush1.msra.mxu0 0.0
        %988 = vmatprep.subr.mxu0 0.0
        %989 = vmatpush1.msra.mxu0 0.0
        %990 = vmatprep.mubr.f32.mxu0 0.0
        %991 = vmatmul.mubr.f32.gmra.mrb[0].mxu0 %v924
        %v992 = vpop.f32.mrb[0].mxu0
        %v993 = vadd.f32 0.0, %v992
        %v994 = vpop.f32.mrb[0].mxu0
        %995 = vdwg.mxu0
        %996 = vrot.lane.b32.xlu0 %v418, 64
        %v997 = vpop.permute.xlu0 %996
        %v1000 = vsel %vm421, %v767, 0
        %1002 = vmatprep.subr.mxu0 0.0
        %1003 = vmatpush1.msra.mxu0 %v997
        %1004 = vmatprep.subr.mxu0 0.0
        %1005 = vmatpush1.msra.mxu0 0.0
        %1006 = vmatprep.subr.mxu0 0.0
        %1007 = vmatpush1.msra.mxu0 0.0
        %1008 = vmatprep.subr.mxu0 0.0
        %1009 = vmatpush1.msra.mxu0 0.0
        %1010 = vmatprep.subr.mxu0 0.0
        %1011 = vmatpush1.msra.mxu0 0.0
        %1012 = vmatprep.subr.mxu0 0.0
        %1013 = vmatpush1.msra.mxu0 0.0
        %1014 = vmatprep.subr.mxu0 0.0
        %1015 = vmatpush1.msra.mxu0 0.0
        %1016 = vmatprep.subr.mxu0 0.0
        %1017 = vmatpush1.msra.mxu0 0.0
        %1018 = vmatprep.subr.mxu0 0.0
        %1019 = vmatpush1.msra.mxu0 0.0
        %1020 = vmatprep.subr.mxu0 0.0
        %1021 = vmatpush1.msra.mxu0 0.0
        %1022 = vmatprep.subr.mxu0 0.0
        %1023 = vmatpush1.msra.mxu0 0.0
        %1024 = vmatprep.subr.mxu0 0.0
        %1025 = vmatpush1.msra.mxu0 0.0
        %1026 = vmatprep.subr.mxu0 0.0
        %1027 = vmatpush1.msra.mxu0 0.0
        %1028 = vmatprep.subr.mxu0 0.0
        %1029 = vmatpush1.msra.mxu0 0.0
        %1030 = vmatprep.subr.mxu0 0.0
        %1031 = vmatpush1.msra.mxu0 0.0
        %1032 = vmatprep.subr.mxu0 0.0
        %1033 = vmatpush1.msra.mxu0 0.0
        %1034 = vmatprep.subr.mxu0 0.0
        %1035 = vmatpush1.msra.mxu0 0.0
        %1036 = vmatprep.subr.mxu0 0.0
        %1037 = vmatpush1.msra.mxu0 0.0
        %1038 = vmatprep.subr.mxu0 0.0
        %1039 = vmatpush1.msra.mxu0 0.0
        %1040 = vmatprep.subr.mxu0 0.0
        %1041 = vmatpush1.msra.mxu0 0.0
        %1042 = vmatprep.subr.mxu0 0.0
        %1043 = vmatpush1.msra.mxu0 0.0
        %1044 = vmatprep.subr.mxu0 0.0
        %1045 = vmatpush1.msra.mxu0 0.0
        %1046 = vmatprep.subr.mxu0 0.0
        %1047 = vmatpush1.msra.mxu0 0.0
        %1048 = vmatprep.subr.mxu0 0.0
        %1049 = vmatpush1.msra.mxu0 0.0
        %1050 = vmatprep.subr.mxu0 0.0
        %1051 = vmatpush1.msra.mxu0 0.0
        %1052 = vmatprep.subr.mxu0 0.0
        %1053 = vmatpush1.msra.mxu0 0.0
        %1054 = vmatprep.subr.mxu0 0.0
        %1055 = vmatpush1.msra.mxu0 0.0
        %1056 = vmatprep.subr.mxu0 0.0
        %1057 = vmatpush1.msra.mxu0 0.0
        %1058 = vmatprep.subr.mxu0 0.0
        %1059 = vmatpush1.msra.mxu0 0.0
        %1060 = vmatprep.subr.mxu0 0.0
        %1061 = vmatpush1.msra.mxu0 0.0
        %1062 = vmatprep.subr.mxu0 0.0
        %1063 = vmatpush1.msra.mxu0 0.0
        %1064 = vmatprep.subr.mxu0 0.0
        %1065 = vmatpush1.msra.mxu0 0.0
        %1066 = vmatprep.mubr.f32.mxu0 0.0
        %1067 = vmatmul.mubr.f32.gmra.mrb[0].mxu0 %v1000
        %v1068 = vpop.f32.mrb[0].mxu0
        %v1069 = vadd.f32 0.0, %v1068
        %v1070 = vpop.f32.mrb[0].mxu0
        %1071 = vdwg.mxu0
        %v1072 = vld [vmem:[%s4] sm:$0xff]
        %v1073 = vld [vmem:[%s4 + $0x8] sm:$0xff]
        %v1074 = vld [vmem:[%s4 + $0x10] sm:$0xff]
        %v1075 = vld [vmem:[%s4 + $0x18] sm:$0xff]
        %v1077 = vsel %vm421, %v841, 0
        %1079 = vmatprep.subr.mxu0 0.0
        %1080 = vmatpush1.msra.mxu0 %v1072
        %1081 = vmatprep.subr.mxu0 0.0
        %1082 = vmatpush1.msra.mxu0 0.0
        %1083 = vmatprep.subr.mxu0 0.0
        %1084 = vmatpush1.msra.mxu0 0.0
        %1085 = vmatprep.subr.mxu0 0.0
        %1086 = vmatpush1.msra.mxu0 0.0
        %1087 = vmatprep.subr.mxu0 0.0
        %1088 = vmatpush1.msra.mxu0 0.0
        %1089 = vmatprep.subr.mxu0 0.0
        %1090 = vmatpush1.msra.mxu0 0.0
        %1091 = vmatprep.subr.mxu0 0.0
        %1092 = vmatpush1.msra.mxu0 0.0
        %1093 = vmatprep.subr.mxu0 0.0
        %1094 = vmatpush1.msra.mxu0 0.0
        %1095 = vmatprep.subr.mxu0 0.0
        %1096 = vmatpush1.msra.mxu0 0.0
        %1097 = vmatprep.subr.mxu0 0.0
        %1098 = vmatpush1.msra.mxu0 0.0
        %1099 = vmatprep.subr.mxu0 0.0
        %1100 = vmatpush1.msra.mxu0 0.0
        %1101 = vmatprep.subr.mxu0 0.0
        %1102 = vmatpush1.msra.mxu0 0.0
        %1103 = vmatprep.subr.mxu0 0.0
        %1104 = vmatpush1.msra.mxu0 0.0
        %1105 = vmatprep.subr.mxu0 0.0
        %1106 = vmatpush1.msra.mxu0 0.0
        %1107 = vmatprep.subr.mxu0 0.0
        %1108 = vmatpush1.msra.mxu0 0.0
        %1109 = vmatprep.subr.mxu0 0.0
        %1110 = vmatpush1.msra.mxu0 0.0
        %1111 = vmatprep.subr.mxu0 0.0
        %1112 = vmatpush1.msra.mxu0 0.0
        %1113 = vmatprep.subr.mxu0 0.0
        %1114 = vmatpush1.msra.mxu0 0.0
        %1115 = vmatprep.subr.mxu0 0.0
        %1116 = vmatpush1.msra.mxu0 0.0
        %1117 = vmatprep.subr.mxu0 0.0
        %1118 = vmatpush1.msra.mxu0 0.0
        %1119 = vmatprep.subr.mxu0 0.0
        %1120 = vmatpush1.msra.mxu0 0.0
        %1121 = vmatprep.subr.mxu0 0.0
        %1122 = vmatpush1.msra.mxu0 0.0
        %1123 = vmatprep.subr.mxu0 0.0
        %1124 = vmatpush1.msra.mxu0 0.0
        %1125 = vmatprep.subr.mxu0 0.0
        %1126 = vmatpush1.msra.mxu0 0.0
        %1127 = vmatprep.subr.mxu0 0.0
        %1128 = vmatpush1.msra.mxu0 0.0
        %1129 = vmatprep.subr.mxu0 0.0
        %1130 = vmatpush1.msra.mxu0 0.0
        %1131 = vmatprep.subr.mxu0 0.0
        %1132 = vmatpush1.msra.mxu0 0.0
        %1133 = vmatprep.subr.mxu0 0.0
        %1134 = vmatpush1.msra.mxu0 0.0
        %1135 = vmatprep.subr.mxu0 0.0
        %1136 = vmatpush1.msra.mxu0 0.0
        %1137 = vmatprep.subr.mxu0 0.0
        %1138 = vmatpush1.msra.mxu0 0.0
        %1139 = vmatprep.subr.mxu0 0.0
        %1140 = vmatpush1.msra.mxu0 0.0
        %1141 = vmatprep.subr.mxu0 0.0
        %1142 = vmatpush1.msra.mxu0 0.0
        %1143 = vmatprep.mubr.f32.mxu0 0.0
        %1144 = vmatmul.mubr.f32.gmra.mrb[0].mxu0 %v1077
        %v1145 = vpop.f32.mrb[0].mxu0
        %v1146 = vadd.f32 0.0, %v1145
        %v1147 = vpop.f32.mrb[0].mxu0
        %1148 = vdwg.mxu0
        %v1150 = vsel %vm421, %v917, 0
        %1152 = vmatprep.subr.mxu0 0.0
        %1153 = vmatpush1.msra.mxu0 %v1073
        %1154 = vmatprep.subr.mxu0 0.0
        %1155 = vmatpush1.msra.mxu0 0.0
        %1156 = vmatprep.subr.mxu0 0.0
        %1157 = vmatpush1.msra.mxu0 0.0
        %1158 = vmatprep.subr.mxu0 0.0
        %1159 = vmatpush1.msra.mxu0 0.0
        %1160 = vmatprep.subr.mxu0 0.0
        %1161 = vmatpush1.msra.mxu0 0.0
        %1162 = vmatprep.subr.mxu0 0.0
        %1163 = vmatpush1.msra.mxu0 0.0
        %1164 = vmatprep.subr.mxu0 0.0
        %1165 = vmatpush1.msra.mxu0 0.0
        %1166 = vmatprep.subr.mxu0 0.0
        %1167 = vmatpush1.msra.mxu0 0.0
        %1168 = vmatprep.subr.mxu0 0.0
        %1169 = vmatpush1.msra.mxu0 0.0
        %1170 = vmatprep.subr.mxu0 0.0
        %1171 = vmatpush1.msra.mxu0 0.0
        %1172 = vmatprep.subr.mxu0 0.0
        %1173 = vmatpush1.msra.mxu0 0.0
        %1174 = vmatprep.subr.mxu0 0.0
        %1175 = vmatpush1.msra.mxu0 0.0
        %1176 = vmatprep.subr.mxu0 0.0
        %1177 = vmatpush1.msra.mxu0 0.0
        %1178 = vmatprep.subr.mxu0 0.0
        %1179 = vmatpush1.msra.mxu0 0.0
        %1180 = vmatprep.subr.mxu0 0.0
        %1181 = vmatpush1.msra.mxu0 0.0
        %1182 = vmatprep.subr.mxu0 0.0
        %1183 = vmatpush1.msra.mxu0 0.0
        %1184 = vmatprep.subr.mxu0 0.0
        %1185 = vmatpush1.msra.mxu0 0.0
        %1186 = vmatprep.subr.mxu0 0.0
        %1187 = vmatpush1.msra.mxu0 0.0
        %1188 = vmatprep.subr.mxu0 0.0
        %1189 = vmatpush1.msra.mxu0 0.0
        %1190 = vmatprep.subr.mxu0 0.0
        %1191 = vmatpush1.msra.mxu0 0.0
        %1192 = vmatprep.subr.mxu0 0.0
        %1193 = vmatpush1.msra.mxu0 0.0
        %1194 = vmatprep.subr.mxu0 0.0
        %1195 = vmatpush1.msra.mxu0 0.0
        %1196 = vmatprep.subr.mxu0 0.0
        %1197 = vmatpush1.msra.mxu0 0.0
        %1198 = vmatprep.subr.mxu0 0.0
        %1199 = vmatpush1.msra.mxu0 0.0
        %1200 = vmatprep.subr.mxu0 0.0
        %1201 = vmatpush1.msra.mxu0 0.0
        %1202 = vmatprep.subr.mxu0 0.0
        %1203 = vmatpush1.msra.mxu0 0.0
        %1204 = vmatprep.subr.mxu0 0.0
        %1205 = vmatpush1.msra.mxu0 0.0
        %1206 = vmatprep.subr.mxu0 0.0
        %1207 = vmatpush1.msra.mxu0 0.0
        %1208 = vmatprep.subr.mxu0 0.0
        %1209 = vmatpush1.msra.mxu0 0.0
        %1210 = vmatprep.subr.mxu0 0.0
        %1211 = vmatpush1.msra.mxu0 0.0
        %1212 = vmatprep.subr.mxu0 0.0
        %1213 = vmatpush1.msra.mxu0 0.0
        %1214 = vmatprep.subr.mxu0 0.0
        %1215 = vmatpush1.msra.mxu0 0.0
        %1216 = vmatprep.mubr.f32.mxu0 0.0
        %1217 = vmatmul.mubr.f32.gmra.mrb[0].mxu0 %v1150
        %v1218 = vpop.f32.mrb[0].mxu0
        %v1219 = vadd.f32 0.0, %v1218
        %v1220 = vpop.f32.mrb[0].mxu0
        %1221 = vdwg.mxu0
        %v1223 = vsel %vm421, %v993, 0
        %1225 = vmatprep.subr.mxu0 0.0
        %1226 = vmatpush1.msra.mxu0 %v1074
        %1227 = vmatprep.subr.mxu0 0.0
        %1228 = vmatpush1.msra.mxu0 0.0
        %1229 = vmatprep.subr.mxu0 0.0
        %1230 = vmatpush1.msra.mxu0 0.0
        %1231 = vmatprep.subr.mxu0 0.0
        %1232 = vmatpush1.msra.mxu0 0.0
        %1233 = vmatprep.subr.mxu0 0.0
        %1234 = vmatpush1.msra.mxu0 0.0
        %1235 = vmatprep.subr.mxu0 0.0
        %1236 = vmatpush1.msra.mxu0 0.0
        %1237 = vmatprep.subr.mxu0 0.0
        %1238 = vmatpush1.msra.mxu0 0.0
        %1239 = vmatprep.subr.mxu0 0.0
        %1240 = vmatpush1.msra.mxu0 0.0
        %1241 = vmatprep.subr.mxu0 0.0
        %1242 = vmatpush1.msra.mxu0 0.0
        %1243 = vmatprep.subr.mxu0 0.0
        %1244 = vmatpush1.msra.mxu0 0.0
        %1245 = vmatprep.subr.mxu0 0.0
        %1246 = vmatpush1.msra.mxu0 0.0
        %1247 = vmatprep.subr.mxu0 0.0
        %1248 = vmatpush1.msra.mxu0 0.0
        %1249 = vmatprep.subr.mxu0 0.0
        %1250 = vmatpush1.msra.mxu0 0.0
        %1251 = vmatprep.subr.mxu0 0.0
        %1252 = vmatpush1.msra.mxu0 0.0
        %1253 = vmatprep.subr.mxu0 0.0
        %1254 = vmatpush1.msra.mxu0 0.0
        %1255 = vmatprep.subr.mxu0 0.0
        %1256 = vmatpush1.msra.mxu0 0.0
        %1257 = vmatprep.subr.mxu0 0.0
        %1258 = vmatpush1.msra.mxu0 0.0
        %1259 = vmatprep.subr.mxu0 0.0
        %1260 = vmatpush1.msra.mxu0 0.0
        %1261 = vmatprep.subr.mxu0 0.0
        %1262 = vmatpush1.msra.mxu0 0.0
        %1263 = vmatprep.subr.mxu0 0.0
        %1264 = vmatpush1.msra.mxu0 0.0
        %1265 = vmatprep.subr.mxu0 0.0
        %1266 = vmatpush1.msra.mxu0 0.0
        %1267 = vmatprep.subr.mxu0 0.0
        %1268 = vmatpush1.msra.mxu0 0.0
        %1269 = vmatprep.subr.mxu0 0.0
        %1270 = vmatpush1.msra.mxu0 0.0
        %1271 = vmatprep.subr.mxu0 0.0
        %1272 = vmatpush1.msra.mxu0 0.0
        %1273 = vmatprep.subr.mxu0 0.0
        %1274 = vmatpush1.msra.mxu0 0.0
        %1275 = vmatprep.subr.mxu0 0.0
        %1276 = vmatpush1.msra.mxu0 0.0
        %1277 = vmatprep.subr.mxu0 0.0
        %1278 = vmatpush1.msra.mxu0 0.0
        %1279 = vmatprep.subr.mxu0 0.0
        %1280 = vmatpush1.msra.mxu0 0.0
        %1281 = vmatprep.subr.mxu0 0.0
        %1282 = vmatpush1.msra.mxu0 0.0
        %1283 = vmatprep.subr.mxu0 0.0
        %1284 = vmatpush1.msra.mxu0 0.0
        %1285 = vmatprep.subr.mxu0 0.0
        %1286 = vmatpush1.msra.mxu0 0.0
        %1287 = vmatprep.subr.mxu0 0.0
        %1288 = vmatpush1.msra.mxu0 0.0
        %1289 = vmatprep.mubr.f32.mxu0 0.0
        %1290 = vmatmul.mubr.f32.gmra.mrb[0].mxu0 %v1223
        %v1291 = vpop.f32.mrb[0].mxu0
        %v1292 = vadd.f32 0.0, %v1291
        %v1293 = vpop.f32.mrb[0].mxu0
        %1294 = vdwg.mxu0
        %v1296 = vsel %vm421, %v1069, 0
        %1298 = vmatprep.subr.mxu0 0.0
        %1299 = vmatpush1.msra.mxu0 %v1075
        %1300 = vmatprep.subr.mxu0 0.0
        %1301 = vmatpush1.msra.mxu0 0.0
        %1302 = vmatprep.subr.mxu0 0.0
        %1303 = vmatpush1.msra.mxu0 0.0
        %1304 = vmatprep.subr.mxu0 0.0
        %1305 = vmatpush1.msra.mxu0 0.0
        %1306 = vmatprep.subr.mxu0 0.0
        %1307 = vmatpush1.msra.mxu0 0.0
        %1308 = vmatprep.subr.mxu0 0.0
        %1309 = vmatpush1.msra.mxu0 0.0
        %1310 = vmatprep.subr.mxu0 0.0
        %1311 = vmatpush1.msra.mxu0 0.0
        %1312 = vmatprep.subr.mxu0 0.0
        %1313 = vmatpush1.msra.mxu0 0.0
        %1314 = vmatprep.subr.mxu0 0.0
        %1315 = vmatpush1.msra.mxu0 0.0
        %1316 = vmatprep.subr.mxu0 0.0
        %1317 = vmatpush1.msra.mxu0 0.0
        %1318 = vmatprep.subr.mxu0 0.0
        %1319 = vmatpush1.msra.mxu0 0.0
        %1320 = vmatprep.subr.mxu0 0.0
        %1321 = vmatpush1.msra.mxu0 0.0
        %1322 = vmatprep.subr.mxu0 0.0
        %1323 = vmatpush1.msra.mxu0 0.0
        %1324 = vmatprep.subr.mxu0 0.0
        %1325 = vmatpush1.msra.mxu0 0.0
        %1326 = vmatprep.subr.mxu0 0.0
        %1327 = vmatpush1.msra.mxu0 0.0
        %1328 = vmatprep.subr.mxu0 0.0
        %1329 = vmatpush1.msra.mxu0 0.0
        %1330 = vmatprep.subr.mxu0 0.0
        %1331 = vmatpush1.msra.mxu0 0.0
        %1332 = vmatprep.subr.mxu0 0.0
        %1333 = vmatpush1.msra.mxu0 0.0
        %1334 = vmatprep.subr.mxu0 0.0
        %1335 = vmatpush1.msra.mxu0 0.0
        %1336 = vmatprep.subr.mxu0 0.0
        %1337 = vmatpush1.msra.mxu0 0.0
        %1338 = vmatprep.subr.mxu0 0.0
        %1339 = vmatpush1.msra.mxu0 0.0
        %1340 = vmatprep.subr.mxu0 0.0
        %1341 = vmatpush1.msra.mxu0 0.0
        %1342 = vmatprep.subr.mxu0 0.0
        %1343 = vmatpush1.msra.mxu0 0.0
        %1344 = vmatprep.subr.mxu0 0.0
        %1345 = vmatpush1.msra.mxu0 0.0
        %1346 = vmatprep.subr.mxu0 0.0
        %1347 = vmatpush1.msra.mxu0 0.0
        %1348 = vmatprep.subr.mxu0 0.0
        %1349 = vmatpush1.msra.mxu0 0.0
        %1350 = vmatprep.subr.mxu0 0.0
        %1351 = vmatpush1.msra.mxu0 0.0
        %1352 = vmatprep.subr.mxu0 0.0
        %1353 = vmatpush1.msra.mxu0 0.0
        %1354 = vmatprep.subr.mxu0 0.0
        %1355 = vmatpush1.msra.mxu0 0.0
        %1356 = vmatprep.subr.mxu0 0.0
        %1357 = vmatpush1.msra.mxu0 0.0
        %1358 = vmatprep.subr.mxu0 0.0
        %1359 = vmatpush1.msra.mxu0 0.0
        %1360 = vmatprep.subr.mxu0 0.0
        %1361 = vmatpush1.msra.mxu0 0.0
        %1362 = vmatprep.mubr.f32.mxu0 0.0
        %1363 = vmatmul.mubr.f32.gmra.mrb[0].mxu0 %v1296
        %v1364 = vpop.f32.mrb[0].mxu0
        %v1365 = vadd.f32 0.0, %v1364
        %v1366 = vpop.f32.mrb[0].mxu0
        %1367 = vdwg.mxu0
        %v1368 = vsel %vm303, %v1146, 0.0
        %v1369 = vsel %vm303, %v1219, 0.0
        %v1370 = vadd.f32 %v1368, %v1369
        %v1371 = vsel %vm303, %v1292, 0.0
        %v1372 = vadd.f32 %v1370, %v1371
        %v1373 = vsel %vm303, %v1365, 0.0
        %v1374 = vadd.f32 %v1372, %v1373
        %v1375 = vlaneseq
        %v1376 = vshrl.u32 %v1375, 7
        %v1377 = vsub.s32 4, %v1376
        %v1378 = vrot.slane %v302, %v1377
        %v1379 = vadd.f32 %v1374, %v1378
        %v1380 = vadd.f32 %v301, %v1379
        %v1381 = vsel %vm303, %v1380, 0.0
        %1382 = vadd.xlane.f32.xlu0 %v1381
        %v1383 = vpop.xlane.xlu0 %1382
        %v1384 = vmul.f32 %v1383, %v307
        %v1385 = vsub.f32 %v1380, %v1384
        %v1386 = vmul.f32 %v1385, %v1385
        %v1387 = vsel %vm303, %v1386, 0.0
        %1388 = vadd.xlane.f32.xlu0 %v1387
        %v1389 = vpop.xlane.xlu0 %1388
        %v1390 = vmul.f32 %v1389, %v307
        %v1391 = vadd.f32 %v1390, 1e-06
        %v1392 = vrsqrt.pop %v1391
        %v1393 = vmul.f32 %v1385, %v1392
        %v1394 = vlaneseq
        %v1395 = vshrl.u32 %v1394, 7
        %v1396 = vsub.s32 2, %v1395
        %v1397 = vrot.slane %v302, %v1396
        %v1398 = vmul.f32 %v1393, %v1397
        %v1399 = vlaneseq
        %v1400 = vshrl.u32 %v1399, 7
        %v1401 = vsub.s32 3, %v1400
        %v1402 = vrot.slane %v302, %v1401
        %v1403 = vadd.f32 %v1398, %v1402
        %v1404 = vld [vmem:[%s5] sm:$0xff]
        %v1405 = vld [vmem:[%s5 + $0x8] sm:$0xff]
        %v1406 = vld [vmem:[%s5 + $0x10] sm:$0xff]
        %v1407 = vld [vmem:[%s5 + $0x18] sm:$0xff]
        %v1408 = vld [vmem:[%s6] sm:$0x1]
        %v1410 = vlaneseq
        %v1411 = vshrl.u32 %v1410, 7
        %v1412 = vsub.s32 0, %v1411
        %v1413 = vrot.slane %v1408, %v1412
        %v1416 = vsel %vm303, %v1403, 0
        %1418 = vmatprep.subr.mxu0 0.0
        %1419 = vmatpush1.msra.mxu0 %v1404
        %1420 = vmatprep.subr.mxu0 0.0
        %1421 = vmatpush1.msra.mxu0 %v1405
        %1422 = vmatprep.subr.mxu0 0.0
        %1423 = vmatpush1.msra.mxu0 %v1406
        %1424 = vmatprep.subr.mxu0 0.0
        %1425 = vmatpush1.msra.mxu0 %v1407
        %1426 = vmatprep.subr.mxu0 0.0
        %1427 = vmatpush1.msra.mxu0 0.0
        %1428 = vmatprep.subr.mxu0 0.0
        %1429 = vmatpush1.msra.mxu0 0.0
        %1430 = vmatprep.subr.mxu0 0.0
        %1431 = vmatpush1.msra.mxu0 0.0
        %1432 = vmatprep.subr.mxu0 0.0
        %1433 = vmatpush1.msra.mxu0 0.0
        %1434 = vmatprep.subr.mxu0 0.0
        %1435 = vmatpush1.msra.mxu0 0.0
        %1436 = vmatprep.subr.mxu0 0.0
        %1437 = vmatpush1.msra.mxu0 0.0
        %1438 = vmatprep.subr.mxu0 0.0
        %1439 = vmatpush1.msra.mxu0 0.0
        %1440 = vmatprep.subr.mxu0 0.0
        %1441 = vmatpush1.msra.mxu0 0.0
        %1442 = vmatprep.subr.mxu0 0.0
        %1443 = vmatpush1.msra.mxu0 0.0
        %1444 = vmatprep.subr.mxu0 0.0
        %1445 = vmatpush1.msra.mxu0 0.0
        %1446 = vmatprep.subr.mxu0 0.0
        %1447 = vmatpush1.msra.mxu0 0.0
        %1448 = vmatprep.subr.mxu0 0.0
        %1449 = vmatpush1.msra.mxu0 0.0
        %1450 = vmatprep.subr.mxu0 0.0
        %1451 = vmatpush1.msra.mxu0 0.0
        %1452 = vmatprep.subr.mxu0 0.0
        %1453 = vmatpush1.msra.mxu0 0.0
        %1454 = vmatprep.subr.mxu0 0.0
        %1455 = vmatpush1.msra.mxu0 0.0
        %1456 = vmatprep.subr.mxu0 0.0
        %1457 = vmatpush1.msra.mxu0 0.0
        %1458 = vmatprep.subr.mxu0 0.0
        %1459 = vmatpush1.msra.mxu0 0.0
        %1460 = vmatprep.subr.mxu0 0.0
        %1461 = vmatpush1.msra.mxu0 0.0
        %1462 = vmatprep.subr.mxu0 0.0
        %1463 = vmatpush1.msra.mxu0 0.0
        %1464 = vmatprep.subr.mxu0 0.0
        %1465 = vmatpush1.msra.mxu0 0.0
        %1466 = vmatprep.subr.mxu0 0.0
        %1467 = vmatpush1.msra.mxu0 0.0
        %1468 = vmatprep.subr.mxu0 0.0
        %1469 = vmatpush1.msra.mxu0 0.0
        %1470 = vmatprep.subr.mxu0 0.0
        %1471 = vmatpush1.msra.mxu0 0.0
        %1472 = vmatprep.subr.mxu0 0.0
        %1473 = vmatpush1.msra.mxu0 0.0
        %1474 = vmatprep.subr.mxu0 0.0
        %1475 = vmatpush1.msra.mxu0 0.0
        %1476 = vmatprep.subr.mxu0 0.0
        %1477 = vmatpush1.msra.mxu0 0.0
        %1478 = vmatprep.subr.mxu0 0.0
        %1479 = vmatpush1.msra.mxu0 0.0
        %1480 = vmatprep.subr.mxu0 0.0
        %1481 = vmatpush1.msra.mxu0 0.0
        %1482 = vmatprep.mubr.f32.mxu0 0.0
        %1483 = vmatmul.mubr.f32.gmra.mrb[0].mxu0 %v1416
        %v1484 = vpop.f32.mrb[0].mxu0
        %v1485 = vadd.f32 %v1413, %v1484
        %v1486 = vpop.f32.mrb[0].mxu0
        %1487 = vdwg.mxu0
        %v1488 = vmul.f32 %v1485, 0.5
        %v1489 = vmul.f32 %v1485, 0.70710677
        %v1490 = verf.f32.pop %v1489
        %v1491 = vadd.f32 %v1490, 1.0
        %v1492 = vmul.f32 %v1488, %v1491
        %v1493 = vld [vmem:[%s7] sm:$0xff]
        %v1494 = vld [vmem:[%s7 + $0x8] sm:$0xff]
        %v1495 = vld [vmem:[%s7 + $0x10] sm:$0xff]
        %v1496 = vld [vmem:[%s7 + $0x18] sm:$0xff]
        %v1497 = vld [vmem:[%s7 + $0x20] sm:$0xff]
        %v1498 = vld [vmem:[%s7 + $0x28] sm:$0xff]
        %v1499 = vld [vmem:[%s7 + $0x30] sm:$0xff]
        %v1500 = vld [vmem:[%s7 + $0x38] sm:$0xff]
        %v1501 = vld [vmem:[%s7 + $0x40] sm:$0xff]
        %v1502 = vld [vmem:[%s7 + $0x48] sm:$0xff]
        %v1503 = vld [vmem:[%s7 + $0x50] sm:$0xff]
        %v1504 = vld [vmem:[%s7 + $0x58] sm:$0xff]
        %v1505 = vld [vmem:[%s7 + $0x60] sm:$0xff]
        %v1506 = vld [vmem:[%s7 + $0x68] sm:$0xff]
        %v1507 = vld [vmem:[%s7 + $0x70] sm:$0xff]
        %v1508 = vld [vmem:[%s7 + $0x78] sm:$0xff]
        %v1509 = vlaneseq
        %v1510 = vshrl.u32 %v1509, 7
        %v1511 = vsub.s32 5, %v1510
        %v1512 = vrot.slane %v302, %v1511
        %1513 = vmatprep.subr.mxu0 0.0
        %1514 = vmatpush1.msra.mxu0 %v1493
        %1515 = vmatprep.subr.mxu0 0.0
        %1516 = vmatpush1.msra.mxu0 %v1494
        %1517 = vmatprep.subr.mxu0 0.0
        %1518 = vmatpush1.msra.mxu0 %v1495
        %1519 = vmatprep.subr.mxu0 0.0
        %1520 = vmatpush1.msra.mxu0 %v1496
        %1521 = vmatprep.subr.mxu0 0.0
        %1522 = vmatpush1.msra.mxu0 %v1497
        %1523 = vmatprep.subr.mxu0 0.0
        %1524 = vmatpush1.msra.mxu0 %v1498
        %1525 = vmatprep.subr.mxu0 0.0
        %1526 = vmatpush1.msra.mxu0 %v1499
        %1527 = vmatprep.subr.mxu0 0.0
        %1528 = vmatpush1.msra.mxu0 %v1500
        %1529 = vmatprep.subr.mxu0 0.0
        %1530 = vmatpush1.msra.mxu0 %v1501
        %1531 = vmatprep.subr.mxu0 0.0
        %1532 = vmatpush1.msra.mxu0 %v1502
        %1533 = vmatprep.subr.mxu0 0.0
        %1534 = vmatpush1.msra.mxu0 %v1503
        %1535 = vmatprep.subr.mxu0 0.0
        %1536 = vmatpush1.msra.mxu0 %v1504
        %1537 = vmatprep.subr.mxu0 0.0
        %1538 = vmatpush1.msra.mxu0 %v1505
        %1539 = vmatprep.subr.mxu0 0.0
        %1540 = vmatpush1.msra.mxu0 %v1506
        %1541 = vmatprep.subr.mxu0 0.0
        %1542 = vmatpush1.msra.mxu0 %v1507
        %1543 = vmatprep.subr.mxu0 0.0
        %1544 = vmatpush1.msra.mxu0 %v1508
        %1545 = vmatprep.subr.mxu0 0.0
        %1546 = vmatpush1.msra.mxu0 0.0
        %1547 = vmatprep.subr.mxu0 0.0
        %1548 = vmatpush1.msra.mxu0 0.0
        %1549 = vmatprep.subr.mxu0 0.0
        %1550 = vmatpush1.msra.mxu0 0.0
        %1551 = vmatprep.subr.mxu0 0.0
        %1552 = vmatpush1.msra.mxu0 0.0
        %1553 = vmatprep.subr.mxu0 0.0
        %1554 = vmatpush1.msra.mxu0 0.0
        %1555 = vmatprep.subr.mxu0 0.0
        %1556 = vmatpush1.msra.mxu0 0.0
        %1557 = vmatprep.subr.mxu0 0.0
        %1558 = vmatpush1.msra.mxu0 0.0
        %1559 = vmatprep.subr.mxu0 0.0
        %1560 = vmatpush1.msra.mxu0 0.0
        %1561 = vmatprep.subr.mxu0 0.0
        %1562 = vmatpush1.msra.mxu0 0.0
        %1563 = vmatprep.subr.mxu0 0.0
        %1564 = vmatpush1.msra.mxu0 0.0
        %1565 = vmatprep.subr.mxu0 0.0
        %1566 = vmatpush1.msra.mxu0 0.0
        %1567 = vmatprep.subr.mxu0 0.0
        %1568 = vmatpush1.msra.mxu0 0.0
        %1569 = vmatprep.subr.mxu0 0.0
        %1570 = vmatpush1.msra.mxu0 0.0
        %1571 = vmatprep.subr.mxu0 0.0
        %1572 = vmatpush1.msra.mxu0 0.0
        %1573 = vmatprep.subr.mxu0 0.0
        %1574 = vmatpush1.msra.mxu0 0.0
        %1575 = vmatprep.subr.mxu0 0.0
        %1576 = vmatpush1.msra.mxu0 0.0
        %1577 = vmatprep.mubr.f32.mxu0 0.0
        %1578 = vmatmul.mubr.f32.gmra.mrb[0].mxu0 %v1492
        %v1579 = vpop.f32.mrb[0].mxu0
        %v1580 = vadd.f32 %v1512, %v1579
        %v1581 = vpop.f32.mrb[0].mxu0
        %1582 = vdwg.mxu0
        %v1583 = vadd.f32 %v1580, %v1380
        %1584 = vst.msk [vmem:[%s296] sm:$0xff] %vm303, %v1583
        %s1585 = sand.u32 %s203, 1
        %s1586 = scalar_lea.sflag [#allocation3], %s1585
        %s1587 = sand.u32 %s203, 1
        %s1588 = smul.addr %s1587, 8
        %s1589 = scalar_lea.vmem [#allocation2], %s1588
        // Predicated region
        $region53: #{vit_encoder.1} parent=51 // pred_check
          %p1590 = pneg %p213
        $region54: #{vit_encoder.1} parent=51 // pred_check_branch
          %1592 = sbr.rel (%p1590) target = $region56
        $region55: #{vit_encoder.1} parent=51 // pred_region
          %s1594 = ssub.s32 128, 128
          %1595 = vsyncadd %s1586, %s1594
          %s1596 = smul.addr %s22, 128
          %s1597 = scalar_lea.hbm %s8, %s1596
          %s1599 = sshll.u32 %s1589, 4
          %s1600 = int_to_ptr.vmem [resolvable:$true] %s1599
          %1602 = dma.vmem_to_hbm [thread:$0]  %s1600, 128, %s1597, %s1586
        $region56: #{vit_encoder.1} parent=51 // pred_fallthru
          _
      $region52: #{vit_encoder.1} parent=5 // pred_fallthru
        _
      %p1603 = scmp.le.s32.totalorder 2, %s17
      // Predicated region
      $region57: #{vit_encoder.1} parent=5 // pred_check
        %p1604 = pneg %p1603
      $region58: #{vit_encoder.1} parent=5 // pred_check_branch
        %1606 = sbr.rel (%p1604) target = $region60
      $region59: #{vit_encoder.1} parent=5 // pred_region
        %s1607 = ssub.s32 %s17, 2
        // Predicated region
        $region61: #{vit_encoder.1} parent=59 // pred_check
          %p1608 = pneg %p219
        $region62: #{vit_encoder.1} parent=59 // pred_check_branch
          %1610 = sbr.rel (%p1608) target = $region64
        $region63: #{vit_encoder.1} parent=59 // pred_region
          %s1611 = sand.u32 %s204, 1
          %s1612 = scalar_lea.sflag [#allocation3], %s1611
          %s1613 = sand.u32 %s204, 1
          %s1614 = smul.addr %s1613, 8
          %s1615 = scalar_lea.vmem [#allocation2], %s1614
          %1616 = dma.done %s1612, 128
        $region64: #{vit_encoder.1} parent=59 // pred_fallthru
          _
      $region60: #{vit_encoder.1} parent=5 // pred_fallthru
        _
    $region6: #{vit_encoder.1} parent=1 // loop_footer
      %s21 = sadd.s32 1, %s17
    $region7: #{vit_encoder.1} parent=1 // loop_footer_branch
      %16 = sbr.rel target = $region3
    $region8: #{vit_encoder.1} parent=1 // loop_exit
      _
    %1617 = vsyncpa [#allocation3], 1
    %s1618 = scalar_lea.sflag [#allocation3], 1
    %1619 = vsyncpa %s1618, 1

</llo_original>
